<compile_context>
chip_gen: v7x
topology: tpu7x:2x2x1
jax: 0.10.0
libtpu: 0.0.40
codegen_flags: <defaults>
</compile_context>

<pallas_src>
import jax
import jax.numpy as jnp
from jax.experimental import pallas as pl
from jax.experimental.pallas import tpu as pltpu

_LANES = 128
_SMALL_N = 64 * 1024                 # below this a pallas_call is pure launch overhead
_VMEM_LIMIT = 32 * 1024 * 1024       # explicit scoped-VMEM budget (safe on v5e/v6e/v7x)


def _sublanes_for(dtype):
    """Min sublane count so (sub, 128) is a legal TPU tile for `dtype`."""
    return max(8, 32 // jnp.dtype(dtype).itemsize)    # f32: 8, bf16: 16, int8/fp8: 32


def _bce_elem(x, target):
    """Numerically stable elementwise BCE-with-logits vs a Python-constant target."""
    x = x.astype(jnp.float32)
    softplus = jnp.log(1.0 + jnp.exp(-jnp.abs(x)))     # exp(-|x|) in (0, 1]: no overflow
    if target == 0.0:
        return jnp.maximum(x, 0.0) + softplus
    if target == 1.0:                                  # max(x,0) - x == max(-x,0)
        return jnp.maximum(-x, 0.0) + softplus
    return jnp.maximum(x, 0.0) - target * x + softplus


def _make_bce_sum_kernel(targets, gb, last_valid, n_blocks_exact, n_blocks_grid, inner):
    """Kernel summing BCE over up to 2 same-shaped inputs into a (sub, 128) acc."""
    n_in = len(targets)
    uniform = (last_valid == gb) and (n_blocks_grid == n_blocks_exact)

    def block_sum(x_refs, valid):
        acc = None
        for x_ref, t in zip(x_refs, targets):
            xv = x_ref[...] if valid == gb else x_ref[0:valid]   # static slice
            l = _bce_elem(xv, t)
            acc = l if acc is None else acc + l
        return jnp.sum(acc, axis=0)      # (groups, sub, 128) -> (sub, 128): VPU adds

    def kernel(*refs):
        x_refs, o_ref = refs[:n_in], refs[n_in]
        s = pl.program_id(0)
        i = pl.program_id(1)

        @pl.when(i == 0)
        def _init():
            o_ref[...] = jnp.zeros_like(o_ref)

        if uniform:
            o_ref[...] += block_sum(x_refs, gb)
        else:
            bi = s * inner + i

            @pl.when(bi < n_blocks_exact - 1)
            def _full():
                o_ref[...] += block_sum(x_refs, gb)

            @pl.when(bi == n_blocks_exact - 1)
            def _partial():
                o_ref[...] += block_sum(x_refs, last_valid)
            # bi > n_blocks_exact - 1: clamped duplicate block, no compute.

    return kernel


def _bce_sum(xs, targets):
    """sum_k sum_elem BCEWithLogits(xs[k], targets[k]).  All xs share shape+dtype.

    Returns (total_sum_f32, elements_per_input)."""
    n = xs[0].size
    dtype = xs[0].dtype
    sub = _sublanes_for(dtype)
    group = sub * _LANES

    # Tiny inputs: skip the kernel entirely.
    if n < _SMALL_N or n < group:
        total = jnp.float32(0.0)
        for x, t in zip(xs, targets):
            total = total + jnp.sum(_bce_elem(jnp.ravel(x), t))
        return total, n

    n_groups = n // group
    n_bulk = n_groups * group
    flats = [jnp.ravel(x) for x in xs]           # free reshape for contiguous inputs

    # Ragged (< group) element tail handled with plain jnp; the common aligned case
    # (n % group == 0) is a pure zero-copy reshape with no pad and no slice.
    tail_total = jnp.float32(0.0)
    if n_bulk != n:
        # TODO(synk): the bulk prefix slice still materializes one copy for unaligned
        # sizes; a fully copy-free path needs an ANY-memspace manual-DMA kernel (or
        # allow_input_fusion).  Aligned shapes (the common case) take no copy at all.
        for f, t in zip(flats, targets):
            tail_total = tail_total + jnp.sum(_bce_elem(f[n_bulk:], t))
        bulk = [f[:n_bulk].reshape(n_groups, sub, _LANES) for f in flats]
    else:
        bulk = [f.reshape(n_groups, sub, _LANES) for f in flats]

    # Block sizing: ~2 MiB of input bytes per block for one input, ~1 MiB each for
    # two (keeps 2 inputs x 2 pipeline buffers x block + f32 intermediates well inside
    # v5e's 16 MiB scoped default and v7x's 64 MiB physical VMEM).
    per_input_bytes = (2 * 1024 * 1024) if len(xs) == 1 else (1 * 1024 * 1024)
    max_groups = max(8, per_input_bytes // (group * jnp.dtype(dtype).itemsize))

    if n_groups <= max_groups:
        n_super, inner, gb = 1, 1, n_groups
    else:
        # Multi-block: split across 2 cores (engages both TCs on v7x megacore-style;
        # harmless on single-TC v5e/v6e).
        n_super = 2
        per_core = pl.cdiv(n_groups, n_super)
        inner = pl.cdiv(per_core, max_groups)
        gb = pl.cdiv(per_core, inner)

    n_blocks_exact = pl.cdiv(n_groups, gb)        # blocks that actually hold data
    n_blocks_grid = n_super * inner               # >= n_blocks_exact
    last_valid = n_groups - (n_blocks_exact - 1) * gb
    clamp = n_blocks_grid != n_blocks_exact

    def in_index_map(s, i):
        bi = s * inner + i
        if clamp:                                  # keep duplicate blocks in-bounds
            bi = jnp.minimum(bi, n_blocks_exact - 1)
        return (bi, 0, 0)

    kernel = _make_bce_sum_kernel(tuple(float(t) for t in targets), gb, last_valid,
                                  n_blocks_exact, n_blocks_grid, inner)

    in_spec = pl.BlockSpec((gb, sub, _LANES), in_index_map)

    partial_sums = pl.pallas_call(
        kernel,
        out_shape=jax.ShapeDtypeStruct((n_super * sub, _LANES), jnp.float32),
        grid_spec=pltpu.PrefetchScalarGridSpec(
            num_scalar_prefetch=0,
            grid=(n_super, inner),
            in_specs=[in_spec] * len(xs),
            out_specs=pl.BlockSpec((sub, _LANES), lambda s, i: (s, 0)),
        ),
        compiler_params=pltpu.CompilerParams(
            # TODO(synk): on v7x verify "parallel" shards axis 0 across both TCs;
            # if not, switch that axis to pltpu.CORE_PARALLEL.
            dimension_semantics=("parallel", "arbitrary"),
            vmem_limit_bytes=_VMEM_LIMIT),
    )(*bulk)

    total = jnp.sum(partial_sums) + tail_total
    return total, n


def bce_with_logits_mean(x, target):
    """mean(BCEWithLogitsLoss(x, target * ones_like(x)))."""
    total, n = _bce_sum([x], [target])
    return total / n


class AdversarialLossPallas:
    """JAX/Pallas port of multicolor.losses.AdversarialLoss (no learnable params)."""

    def __init__(self, loss_weight=1.0):
        self.loss_weight = loss_weight

    def __call__(self, real_output, fake_output, is_discriminator=True):
        if is_discriminator:
            if (real_output.shape == fake_output.shape
                    and real_output.dtype == fake_output.dtype):
                # Fused: both BCE terms stream through a single pallas_call.
                total, n = _bce_sum([real_output, fake_output], [0.9, 0.0])
                return total / n
            return (bce_with_logits_mean(real_output, 0.9)
                    + bce_with_logits_mean(fake_output, 0.0))
        return self.loss_weight * bce_with_logits_mean(fake_output, 1.0)


def _bce_mean_ref(x, target):
    """Pure-jnp reference identical to torch BCEWithLogitsLoss(mean)."""
    x = jnp.asarray(x).astype(jnp.float32)
    l = jnp.maximum(x, 0.0) - x * target + jnp.log1p(jnp.exp(-jnp.abs(x)))
    return jnp.mean(l)


if __name__ == "__main__":
    key = jax.random.PRNGKey(0)
    k1, k2, k3, k4, k5, k6, k7 = jax.random.split(key, 7)

    loss_mod = AdversarialLossPallas(loss_weight=1.0)

    # Discriminator logits, NCHW, small shape (tiny-input fast path).
    real_small = jax.random.normal(k1, (2, 4, 16, 16), dtype=jnp.float32)
    fake_small = jax.random.normal(k2, (2, 4, 16, 16), dtype=jnp.float32)
    dis_small = loss_mod(real_small, fake_small, is_discriminator=True)
    gen_small = loss_mod(real_small, fake_small, is_discriminator=False)
    dis_small, gen_small = jax.block_until_ready((dis_small, gen_small))
    dis_small_ref = _bce_mean_ref(real_small, 0.9) + _bce_mean_ref(fake_small, 0.0)
    assert jnp.allclose(dis_small, dis_small_ref, rtol=1e-5, atol=1e-5)
    assert jnp.allclose(gen_small, _bce_mean_ref(fake_small, 1.0), rtol=1e-5, atol=1e-5)

    # Kernel path: fused 2-input discriminator loss + generator loss, single block.
    real = jax.random.normal(k3, (2, 4, 128, 128), dtype=jnp.float32)
    fake = jax.random.normal(k4, (2, 4, 128, 128), dtype=jnp.float32)
    dis = jax.block_until_ready(loss_mod(real, fake, is_discriminator=True))
    dis_ref = _bce_mean_ref(real, 0.9) + _bce_mean_ref(fake, 0.0)
    assert jnp.allclose(dis, dis_ref, rtol=1e-5, atol=1e-5), (dis, dis_ref)
    gen = jax.block_until_ready(loss_mod(real, fake, is_discriminator=False))
    assert jnp.allclose(gen, _bce_mean_ref(fake, 1.0), rtol=1e-5, atol=1e-5)

    # Kernel path: multi-block grid + 2-way core split, evenly divisible.
    x_big = jax.random.normal(k5, (1, 4, 640, 640), dtype=jnp.float32)     # 1600 groups
    got = jax.block_until_ready(bce_with_logits_mean(x_big, 1.0))
    assert jnp.allclose(got, _bce_mean_ref(x_big, 1.0), rtol=2e-5, atol=1e-5)

    # Kernel path: non-dividing last block (in-kernel static masking, no pad copy).
    x_part = jax.random.normal(k6, (1, 1, 1025, 1024), dtype=jnp.float32)  # 1025 groups
    got = jax.block_until_ready(bce_with_logits_mean(x_part, 0.9))
    assert jnp.allclose(got, _bce_mean_ref(x_part, 0.9), rtol=2e-5, atol=1e-5)

    # Kernel path: ragged (<1024) element tail handled by jnp, no jnp.pad.
    x_rag = jax.random.normal(k7, (3, 5, 97, 113), dtype=jnp.float32)      # 164415 elems
    got = jax.block_until_ready(bce_with_logits_mean(x_rag, 0.0))
    assert jnp.allclose(got, _bce_mean_ref(x_rag, 0.0), rtol=2e-5, atol=1e-5)

    # Kernel path: bf16 logits -> 16-sublane groups, f32 accumulation in-kernel.
    x_bf16 = jax.random.normal(k3, (2, 4, 128, 128), dtype=jnp.float32).astype(jnp.bfloat16)
    got = jax.block_until_ready(bce_with_logits_mean(x_bf16, 0.0))
    assert jnp.allclose(got, _bce_mean_ref(x_bf16, 0.0), rtol=1e-4, atol=1e-4)

    print("KERNEL_OK")
</pallas_src>

<mosaic_0001>
module attributes {stable_mosaic.version = 11 : i64} {
  func.func @kernel(%arg0: i32, %arg1: i32, %arg2: memref<128x8x128xf32, #tpu.memory_space<vmem>>, %arg3: memref<128x8x128xf32, #tpu.memory_space<vmem>>, %arg4: memref<8x128xf32, #tpu.memory_space<vmem>>) attributes {dimension_semantics = [#tpu.dimension_semantics<parallel>, #tpu.dimension_semantics<arbitrary>], iteration_bounds = array<i64: 1, 1>, scalar_prefetch = 0 : i64, scratch_operands = 0 : i64, tpu.core_type = #tpu.core_type<tc>, window_params = [{transform_indices = @transform_0, window_bounds = array<i64: 128, 8, 128>}, {transform_indices = @transform_1, window_bounds = array<i64: 128, 8, 128>}, {transform_indices = @transform_2, window_bounds = array<i64: 8, 128>}]} {
    %c0_i32 = arith.constant 0 : i32
    %0 = arith.cmpi eq, %arg1, %c0_i32 : i32
    %1 = arith.extui %0 : i1 to i32
    %c0_i32_0 = arith.constant 0 : i32
    %2 = arith.cmpi ne, %1, %c0_i32_0 : i32
    scf.if %2 {
      %cst_17 = arith.constant 0.000000e+00 : f32
      %33 = vector.broadcast %cst_17 : f32 to vector<8x128xf32>
      %c0_18 = arith.constant 0 : index
      %c0_19 = arith.constant 0 : index
      %34 = vector.load %arg4[%c0_18, %c0_19] : memref<8x128xf32, #tpu.memory_space<vmem>>, vector<8x128xf32>
      tpu.vector_store %arg4[%c0_18, %c0_19], %33 {strides = array<i32>} : memref<8x128xf32, #tpu.memory_space<vmem>>, vector<8x128xf32>,
    } else {
    }
    %c0 = arith.constant 0 : index
    %c0_1 = arith.constant 0 : index
    %3 = vector.load %arg4[%c0, %c0_1] : memref<8x128xf32, #tpu.memory_space<vmem>>, vector<8x128xf32>
    %c0_2 = arith.constant 0 : index
    %c0_3 = arith.constant 0 : index
    %c0_4 = arith.constant 0 : index
    %4 = vector.load %arg2[%c0_2, %c0_3, %c0_4] : memref<128x8x128xf32, #tpu.memory_space<vmem>>, vector<128x8x128xf32>
    %5 = math.absf %4 : vector<128x8x128xf32>
    %cst = arith.constant 0.000000e+00 : f32
    %6 = vector.broadcast %cst : f32 to vector<128x8x128xf32>
    %7 = arith.subf %6, %5 : vector<128x8x128xf32>
    %8 = math.exp %7 : vector<128x8x128xf32>
    %cst_5 = arith.constant 1.000000e+00 : f32
    %9 = vector.broadcast %cst_5 : f32 to vector<128x8x128xf32>
    %10 = arith.addf %9, %8 : vector<128x8x128xf32>
    %11 = math.log %10 : vector<128x8x128xf32>
    %cst_6 = arith.constant 0.000000e+00 : f32
    %12 = vector.broadcast %cst_6 : f32 to vector<128x8x128xf32>
    %13 = arith.maximumf %4, %12 : vector<128x8x128xf32>
    %cst_7 = arith.constant 0.899999976 : f32
    %14 = vector.broadcast %cst_7 : f32 to vector<128x8x128xf32>
    %15 = arith.mulf %14, %4 : vector<128x8x128xf32>
    %16 = arith.subf %13, %15 : vector<128x8x128xf32>
    %17 = arith.addf %16, %11 : vector<128x8x128xf32>
    %c0_8 = arith.constant 0 : index
    %c0_9 = arith.constant 0 : index
    %c0_10 = arith.constant 0 : index
    %18 = vector.load %arg3[%c0_8, %c0_9, %c0_10] : memref<128x8x128xf32, #tpu.memory_space<vmem>>, vector<128x8x128xf32>
    %19 = math.absf %18 : vector<128x8x128xf32>
    %cst_11 = arith.constant 0.000000e+00 : f32
    %20 = vector.broadcast %cst_11 : f32 to vector<128x8x128xf32>
    %21 = arith.subf %20, %19 : vector<128x8x128xf32>
    %22 = math.exp %21 : vector<128x8x128xf32>
    %cst_12 = arith.constant 1.000000e+00 : f32
    %23 = vector.broadcast %cst_12 : f32 to vector<128x8x128xf32>
    %24 = arith.addf %23, %22 : vector<128x8x128xf32>
    %25 = math.log %24 : vector<128x8x128xf32>
    %cst_13 = arith.constant 0.000000e+00 : f32
    %26 = vector.broadcast %cst_13 : f32 to vector<128x8x128xf32>
    %27 = arith.maximumf %18, %26 : vector<128x8x128xf32>
    %28 = arith.addf %27, %25 : vector<128x8x128xf32>
    %29 = arith.addf %17, %28 : vector<128x8x128xf32>
    %cst_14 = arith.constant dense<0.000000e+00> : vector<8x128xf32>
    %30 = vector.multi_reduction <add>, %29, %cst_14 [0] : vector<128x8x128xf32> to vector<8x128xf32>
    %31 = arith.addf %3, %30 : vector<8x128xf32>
    %c0_15 = arith.constant 0 : index
    %c0_16 = arith.constant 0 : index
    %32 = vector.load %arg4[%c0_15, %c0_16] : memref<8x128xf32, #tpu.memory_space<vmem>>, vector<8x128xf32>
    tpu.vector_store %arg4[%c0_15, %c0_16], %31 {strides = array<i32>} : memref<8x128xf32, #tpu.memory_space<vmem>>, vector<8x128xf32>,
    return
  }
  func.func @transform_0(%arg0: i32, %arg1: i32) -> (i32, i32, i32) {
    %c1_i32 = arith.constant 1 : i32
    %0 = arith.muli %arg0, %c1_i32 : i32
    %1 = arith.addi %0, %arg1 : i32
    %c0_i32 = arith.constant 0 : i32
    %c0_i32_0 = arith.constant 0 : i32
    %c0_i32_1 = arith.constant 0 : i32
    return %1, %c0_i32, %c0_i32_0 : i32, i32, i32
  }
  func.func @transform_1(%arg0: i32, %arg1: i32) -> (i32, i32, i32) {
    %c1_i32 = arith.constant 1 : i32
    %0 = arith.muli %arg0, %c1_i32 : i32
    %1 = arith.addi %0, %arg1 : i32
    %c0_i32 = arith.constant 0 : i32
    %c0_i32_0 = arith.constant 0 : i32
    %c0_i32_1 = arith.constant 0 : i32
    return %1, %c0_i32, %c0_i32_0 : i32, i32, i32
  }
  func.func @transform_2(%arg0: i32, %arg1: i32) -> (i32, i32) {
    %c0_i32 = arith.constant 0 : i32
    %c0_i32_0 = arith.constant 0 : i32
    return %arg0, %c0_i32 : i32, i32
  }
}

</mosaic_0001>

<llo_original>
// kernel: tpu_custom_call.1
$region0: #{tpu_custom_call.1}
  #allocation0 [shape = 'u32[]', space=smem, size = 0x4, offset = 0x4, fixed_abs, tag = 'smem constant byte address 0x4 - core index']
  #allocation1 [shape = 'u32[144,128]{1,0:T(1,128)}', space=vmem, size = 0x12000, scoped, tag = 'internal scratch']
  %s0 = inlined_call_operand.hbm [shape: f32[128,8,128], index: 0, kind: input, shape index: {}]
  %s1 = inlined_call_operand.hbm [shape: f32[128,8,128], index: 1, kind: input, shape index: {}]
  %s2 = inlined_call_operand.hbm [shape: f32[8,128], index: 2, kind: output, shape index: {}]
  %s3 = sld [smem:[#allocation0]]
  $region30: #{tpu_custom_call.1} parent=0
    _
  %s5 = ssub.s32 1, %s3
  %s6 = scalar_select 0, %s5, %s3
  $region1: #{tpu_custom_call.1} parent=0
    #allocation2 [shape = 'u8[524288]{0}', space=vmem, size = 0x80000, scoped, tag = 'input window, operand 0, single buffered']
    #allocation3 [shape = 's32[1]{0}', space=sflag, size = 0x4, scoped, tag = 'scoped memory for tpu_custom_call.1']
    #allocation4 [shape = 's32[1]{0}', space=sflag, size = 0x4, scoped, tag = 'scoped memory for tpu_custom_call.1']
    #allocation5 [shape = 'u8[524288]{0}', space=vmem, size = 0x80000, scoped, tag = 'input window, operand 1, single buffered']
    #allocation6 [shape = 's32[1]{0}', space=sflag, size = 0x4, scoped, tag = 'scoped memory for tpu_custom_call.1']
    #allocation7 [shape = 'u8[4096]{0}', space=vmem, size = 0x1000, scoped, tag = 'output window, operand 0, single buffered']
    %7 = vsyncpa [#allocation3], 0
    %8 = vsyncpa [#allocation6], 0
    %9 = vsyncpa [#allocation4], 0
    // Predicated region
    $region2: #{tpu_custom_call.1} parent=1 // pred_check
      _
    $region3: #{tpu_custom_call.1} parent=1 // pred_check_branch
      %11 = sbr.rel (0) target = $region5
    $region4: #{tpu_custom_call.1} parent=1 // pred_region
      %s12 = sadd.s32 0, 0
      %s13 = smul.u32 128, %s12
      %s15 = ssub.s32 16384, 16384
      %16 = vsyncadd [#allocation3], %s15
      %s17 = smul.addr %s13, 128
      %s18 = scalar_lea.hbm %s0, %s17
      %s19 = sshll.u32 [#allocation2], 4
      %s20 = int_to_ptr.vmem [resolvable:$true] %s19
      %25 = dma.hbm_to_vmem [thread:$0]  %s18, 16384, %s20, [#allocation3], 128, 128, 8
    $region5: #{tpu_custom_call.1} parent=1 // pred_fallthru
      _
    // Predicated region
    $region6: #{tpu_custom_call.1} parent=1 // pred_check
      _
    $region7: #{tpu_custom_call.1} parent=1 // pred_check_branch
      %27 = sbr.rel (0) target = $region9
    $region8: #{tpu_custom_call.1} parent=1 // pred_region
      %s28 = sadd.s32 0, 0
      %s29 = smul.u32 128, %s28
      %s31 = ssub.s32 16384, 16384
      %32 = vsyncadd [#allocation6], %s31
      %s33 = smul.addr %s29, 128
      %s34 = scalar_lea.hbm %s1, %s33
      %s35 = sshll.u32 [#allocation5], 4
      %s36 = int_to_ptr.vmem [resolvable:$true] %s35
      %41 = dma.hbm_to_vmem [thread:$0]  %s34, 16384, %s36, [#allocation6], 128, 128, 8
    $region9: #{tpu_custom_call.1} parent=1 // pred_fallthru
      _
    // Predicated region
    $region10: #{tpu_custom_call.1} parent=1 // pred_check
      _
    $region11: #{tpu_custom_call.1} parent=1 // pred_check_branch
      %43 = sbr.rel (0) target = $region13
    $region12: #{tpu_custom_call.1} parent=1 // pred_region
      %44 = dma.done [#allocation3], 16384
    $region13: #{tpu_custom_call.1} parent=1 // pred_fallthru
      _
    // Predicated region
    $region14: #{tpu_custom_call.1} parent=1 // pred_check
      _
    $region15: #{tpu_custom_call.1} parent=1 // pred_check_branch
      %46 = sbr.rel (0) target = $region17
    $region16: #{tpu_custom_call.1} parent=1 // pred_region
      %47 = dma.done [#allocation6], 16384
    $region17: #{tpu_custom_call.1} parent=1 // pred_fallthru
      _
    %s48 = sadd.s32 0, 0
    %s49 = smul.u32 128, %s48
    %s50 = sadd.s32 0, 0
    %s51 = smul.u32 128, %s50
    %p52 = scmp.eq.s32.totalorder 0, 0
    // Predicated region
    $region18: #{tpu_custom_call.1} parent=1 // pred_check
      %p53 = pneg %p52
    $region19: #{tpu_custom_call.1} parent=1 // pred_check_branch
      %55 = sbr.rel (%p53) target = $region21
    $region20: #{tpu_custom_call.1} parent=1 // pred_region
      %56 = vst [vmem:[#allocation7] sm:$0xff] 0.0
    $region21: #{tpu_custom_call.1} parent=1 // pred_fallthru
      _
    %v57 = vld [vmem:[#allocation7] sm:$0xff]
    %v58 = vld [vmem:[#allocation2] sm:$0xff]
    %v59 = vld [vmem:[#allocation2 + $0x8] sm:$0xff]
    %v60 = vld [vmem:[#allocation2 + $0x10] sm:$0xff]
    %v61 = vld [vmem:[#allocation2 + $0x18] sm:$0xff]
    %v62 = vld [vmem:[#allocation2 + $0x20] sm:$0xff]
    %v63 = vld [vmem:[#allocation2 + $0x28] sm:$0xff]
    %v64 = vld [vmem:[#allocation2 + $0x30] sm:$0xff]
    %v65 = vld [vmem:[#allocation2 + $0x38] sm:$0xff]
    %v66 = vld [vmem:[#allocation2 + $0x40] sm:$0xff]
    %v67 = vld [vmem:[#allocation2 + $0x48] sm:$0xff]
    %v68 = vld [vmem:[#allocation2 + $0x50] sm:$0xff]
    %v69 = vld [vmem:[#allocation2 + $0x58] sm:$0xff]
    %v70 = vld [vmem:[#allocation2 + $0x60] sm:$0xff]
    %v71 = vld [vmem:[#allocation2 + $0x68] sm:$0xff]
    %v72 = vld [vmem:[#allocation2 + $0x70] sm:$0xff]
    %v73 = vld [vmem:[#allocation2 + $0x78] sm:$0xff]
    %v74 = vld [vmem:[#allocation2 + $0x80] sm:$0xff]
    %v75 = vld [vmem:[#allocation2 + $0x88] sm:$0xff]
    %v76 = vld [vmem:[#allocation2 + $0x90] sm:$0xff]
    %v77 = vld [vmem:[#allocation2 + $0x98] sm:$0xff]
    %v78 = vld [vmem:[#allocation2 + $0xa0] sm:$0xff]
    %v79 = vld [vmem:[#allocation2 + $0xa8] sm:$0xff]
    %v80 = vld [vmem:[#allocation2 + $0xb0] sm:$0xff]
    %v81 = vld [vmem:[#allocation2 + $0xb8] sm:$0xff]
    %v82 = vld [vmem:[#allocation2 + $0xc0] sm:$0xff]
    %v83 = vld [vmem:[#allocation2 + $0xc8] sm:$0xff]
    %v84 = vld [vmem:[#allocation2 + $0xd0] sm:$0xff]
    %v85 = vld [vmem:[#allocation2 + $0xd8] sm:$0xff]
    %v86 = vld [vmem:[#allocation2 + $0xe0] sm:$0xff]
    %v87 = vld [vmem:[#allocation2 + $0xe8] sm:$0xff]
    %v88 = vld [vmem:[#allocation2 + $0xf0] sm:$0xff]
    %v89 = vld [vmem:[#allocation2 + $0xf8] sm:$0xff]
    %v90 = vld [vmem:[#allocation2 + $0x100] sm:$0xff]
    %v91 = vld [vmem:[#allocation2 + $0x108] sm:$0xff]
    %v92 = vld [vmem:[#allocation2 + $0x110] sm:$0xff]
    %v93 = vld [vmem:[#allocation2 + $0x118] sm:$0xff]
    %v94 = vld [vmem:[#allocation2 + $0x120] sm:$0xff]
    %v95 = vld [vmem:[#allocation2 + $0x128] sm:$0xff]
    %v96 = vld [vmem:[#allocation2 + $0x130] sm:$0xff]
    %v97 = vld [vmem:[#allocation2 + $0x138] sm:$0xff]
    %v98 = vld [vmem:[#allocation2 + $0x140] sm:$0xff]
    %v99 = vld [vmem:[#allocation2 + $0x148] sm:$0xff]
    %v100 = vld [vmem:[#allocation2 + $0x150] sm:$0xff]
    %v101 = vld [vmem:[#allocation2 + $0x158] sm:$0xff]
    %v102 = vld [vmem:[#allocation2 + $0x160] sm:$0xff]
    %v103 = vld [vmem:[#allocation2 + $0x168] sm:$0xff]
    %v104 = vld [vmem:[#allocation2 + $0x170] sm:$0xff]
    %v105 = vld [vmem:[#allocation2 + $0x178] sm:$0xff]
    %v106 = vld [vmem:[#allocation2 + $0x180] sm:$0xff]
    %v107 = vld [vmem:[#allocation2 + $0x188] sm:$0xff]
    %v108 = vld [vmem:[#allocation2 + $0x190] sm:$0xff]
    %v109 = vld [vmem:[#allocation2 + $0x198] sm:$0xff]
    %v110 = vld [vmem:[#allocation2 + $0x1a0] sm:$0xff]
    %v111 = vld [vmem:[#allocation2 + $0x1a8] sm:$0xff]
    %v112 = vld [vmem:[#allocation2 + $0x1b0] sm:$0xff]
    %v113 = vld [vmem:[#allocation2 + $0x1b8] sm:$0xff]
    %v114 = vld [vmem:[#allocation2 + $0x1c0] sm:$0xff]
    %v115 = vld [vmem:[#allocation2 + $0x1c8] sm:$0xff]
    %v116 = vld [vmem:[#allocation2 + $0x1d0] sm:$0xff]
    %v117 = vld [vmem:[#allocation2 + $0x1d8] sm:$0xff]
    %v118 = vld [vmem:[#allocation2 + $0x1e0] sm:$0xff]
    %v119 = vld [vmem:[#allocation2 + $0x1e8] sm:$0xff]
    %v120 = vld [vmem:[#allocation2 + $0x1f0] sm:$0xff]
    %v121 = vld [vmem:[#allocation2 + $0x1f8] sm:$0xff]
    %v122 = vld [vmem:[#allocation2 + $0x200] sm:$0xff]
    %v123 = vld [vmem:[#allocation2 + $0x208] sm:$0xff]
    %v124 = vld [vmem:[#allocation2 + $0x210] sm:$0xff]
    %v125 = vld [vmem:[#allocation2 + $0x218] sm:$0xff]
    %v126 = vld [vmem:[#allocation2 + $0x220] sm:$0xff]
    %v127 = vld [vmem:[#allocation2 + $0x228] sm:$0xff]
    %v128 = vld [vmem:[#allocation2 + $0x230] sm:$0xff]
    %v129 = vld [vmem:[#allocation2 + $0x238] sm:$0xff]
    %v130 = vld [vmem:[#allocation2 + $0x240] sm:$0xff]
    %v131 = vld [vmem:[#allocation2 + $0x248] sm:$0xff]
    %v132 = vld [vmem:[#allocation2 + $0x250] sm:$0xff]
    %v133 = vld [vmem:[#allocation2 + $0x258] sm:$0xff]
    %v134 = vld [vmem:[#allocation2 + $0x260] sm:$0xff]
    %v135 = vld [vmem:[#allocation2 + $0x268] sm:$0xff]
    %v136 = vld [vmem:[#allocation2 + $0x270] sm:$0xff]
    %v137 = vld [vmem:[#allocation2 + $0x278] sm:$0xff]
    %v138 = vld [vmem:[#allocation2 + $0x280] sm:$0xff]
    %v139 = vld [vmem:[#allocation2 + $0x288] sm:$0xff]
    %v140 = vld [vmem:[#allocation2 + $0x290] sm:$0xff]
    %v141 = vld [vmem:[#allocation2 + $0x298] sm:$0xff]
    %v142 = vld [vmem:[#allocation2 + $0x2a0] sm:$0xff]
    %v143 = vld [vmem:[#allocation2 + $0x2a8] sm:$0xff]
    %v144 = vld [vmem:[#allocation2 + $0x2b0] sm:$0xff]
    %v145 = vld [vmem:[#allocation2 + $0x2b8] sm:$0xff]
    %v146 = vld [vmem:[#allocation2 + $0x2c0] sm:$0xff]
    %v147 = vld [vmem:[#allocation2 + $0x2c8] sm:$0xff]
    %v148 = vld [vmem:[#allocation2 + $0x2d0] sm:$0xff]
    %v149 = vld [vmem:[#allocation2 + $0x2d8] sm:$0xff]
    %v150 = vld [vmem:[#allocation2 + $0x2e0] sm:$0xff]
    %v151 = vld [vmem:[#allocation2 + $0x2e8] sm:$0xff]
    %v152 = vld [vmem:[#allocation2 + $0x2f0] sm:$0xff]
    %v153 = vld [vmem:[#allocation2 + $0x2f8] sm:$0xff]
    %v154 = vld [vmem:[#allocation2 + $0x300] sm:$0xff]
    %v155 = vld [vmem:[#allocation2 + $0x308] sm:$0xff]
    %v156 = vld [vmem:[#allocation2 + $0x310] sm:$0xff]
    %v157 = vld [vmem:[#allocation2 + $0x318] sm:$0xff]
    %v158 = vld [vmem:[#allocation2 + $0x320] sm:$0xff]
    %v159 = vld [vmem:[#allocation2 + $0x328] sm:$0xff]
    %v160 = vld [vmem:[#allocation2 + $0x330] sm:$0xff]
    %v161 = vld [vmem:[#allocation2 + $0x338] sm:$0xff]
    %v162 = vld [vmem:[#allocation2 + $0x340] sm:$0xff]
    %v163 = vld [vmem:[#allocation2 + $0x348] sm:$0xff]
    %v164 = vld [vmem:[#allocation2 + $0x350] sm:$0xff]
    %v165 = vld [vmem:[#allocation2 + $0x358] sm:$0xff]
    %v166 = vld [vmem:[#allocation2 + $0x360] sm:$0xff]
    %v167 = vld [vmem:[#allocation2 + $0x368] sm:$0xff]
    %v168 = vld [vmem:[#allocation2 + $0x370] sm:$0xff]
    %v169 = vld [vmem:[#allocation2 + $0x378] sm:$0xff]
    %v170 = vld [vmem:[#allocation2 + $0x380] sm:$0xff]
    %v171 = vld [vmem:[#allocation2 + $0x388] sm:$0xff]
    %v172 = vld [vmem:[#allocation2 + $0x390] sm:$0xff]
    %v173 = vld [vmem:[#allocation2 + $0x398] sm:$0xff]
    %v174 = vld [vmem:[#allocation2 + $0x3a0] sm:$0xff]
    %v175 = vld [vmem:[#allocation2 + $0x3a8] sm:$0xff]
    %v176 = vld [vmem:[#allocation2 + $0x3b0] sm:$0xff]
    %v177 = vld [vmem:[#allocation2 + $0x3b8] sm:$0xff]
    %v178 = vld [vmem:[#allocation2 + $0x3c0] sm:$0xff]
    %v179 = vld [vmem:[#allocation2 + $0x3c8] sm:$0xff]
    %v180 = vld [vmem:[#allocation2 + $0x3d0] sm:$0xff]
    %v181 = vld [vmem:[#allocation2 + $0x3d8] sm:$0xff]
    %v182 = vld [vmem:[#allocation2 + $0x3e0] sm:$0xff]
    %v183 = vld [vmem:[#allocation2 + $0x3e8] sm:$0xff]
    %v184 = vld [vmem:[#allocation2 + $0x3f0] sm:$0xff]
    %v185 = vld [vmem:[#allocation2 + $0x3f8] sm:$0xff]
    %v186 = vand.u32 2147483647, %v58
    %v187 = vand.u32 2147483647, %v59
    %v188 = vand.u32 2147483647, %v60
    %v189 = vand.u32 2147483647, %v61
    %v190 = vand.u32 2147483647, %v62
    %v191 = vand.u32 2147483647, %v63
    %v192 = vand.u32 2147483647, %v64
    %v193 = vand.u32 2147483647, %v65
    %v194 = vand.u32 2147483647, %v66
    %v195 = vand.u32 2147483647, %v67
    %v196 = vand.u32 2147483647, %v68
    %v197 = vand.u32 2147483647, %v69
    %v198 = vand.u32 2147483647, %v70
    %v199 = vand.u32 2147483647, %v71
    %v200 = vand.u32 2147483647, %v72
    %v201 = vand.u32 2147483647, %v73
    %v202 = vand.u32 2147483647, %v74
    %v203 = vand.u32 2147483647, %v75
    %v204 = vand.u32 2147483647, %v76
    %v205 = vand.u32 2147483647, %v77
    %v206 = vand.u32 2147483647, %v78
    %v207 = vand.u32 2147483647, %v79
    %v208 = vand.u32 2147483647, %v80
    %v209 = vand.u32 2147483647, %v81
    %v210 = vand.u32 2147483647, %v82
    %v211 = vand.u32 2147483647, %v83
    %v212 = vand.u32 2147483647, %v84
    %v213 = vand.u32 2147483647, %v85
    %v214 = vand.u32 2147483647, %v86
    %v215 = vand.u32 2147483647, %v87
    %v216 = vand.u32 2147483647, %v88
    %v217 = vand.u32 2147483647, %v89
    %v218 = vand.u32 2147483647, %v90
    %v219 = vand.u32 2147483647, %v91
    %v220 = vand.u32 2147483647, %v92
    %v221 = vand.u32 2147483647, %v93
    %v222 = vand.u32 2147483647, %v94
    %v223 = vand.u32 2147483647, %v95
    %v224 = vand.u32 2147483647, %v96
    %v225 = vand.u32 2147483647, %v97
    %v226 = vand.u32 2147483647, %v98
    %v227 = vand.u32 2147483647, %v99
    %v228 = vand.u32 2147483647, %v100
    %v229 = vand.u32 2147483647, %v101
    %v230 = vand.u32 2147483647, %v102
    %v231 = vand.u32 2147483647, %v103
    %v232 = vand.u32 2147483647, %v104
    %v233 = vand.u32 2147483647, %v105
    %v234 = vand.u32 2147483647, %v106
    %v235 = vand.u32 2147483647, %v107
    %v236 = vand.u32 2147483647, %v108
    %v237 = vand.u32 2147483647, %v109
    %v238 = vand.u32 2147483647, %v110
    %v239 = vand.u32 2147483647, %v111
    %v240 = vand.u32 2147483647, %v112
    %v241 = vand.u32 2147483647, %v113
    %v242 = vand.u32 2147483647, %v114
    %v243 = vand.u32 2147483647, %v115
    %v244 = vand.u32 2147483647, %v116
    %v245 = vand.u32 2147483647, %v117
    %v246 = vand.u32 2147483647, %v118
    %v247 = vand.u32 2147483647, %v119
    %v248 = vand.u32 2147483647, %v120
    %v249 = vand.u32 2147483647, %v121
    %v250 = vand.u32 2147483647, %v122
    %v251 = vand.u32 2147483647, %v123
    %v252 = vand.u32 2147483647, %v124
    %v253 = vand.u32 2147483647, %v125
    %v254 = vand.u32 2147483647, %v126
    %v255 = vand.u32 2147483647, %v127
    %v256 = vand.u32 2147483647, %v128
    %v257 = vand.u32 2147483647, %v129
    %v258 = vand.u32 2147483647, %v130
    %v259 = vand.u32 2147483647, %v131
    %v260 = vand.u32 2147483647, %v132
    %v261 = vand.u32 2147483647, %v133
    %v262 = vand.u32 2147483647, %v134
    %v263 = vand.u32 2147483647, %v135
    %v264 = vand.u32 2147483647, %v136
    %v265 = vand.u32 2147483647, %v137
    %v266 = vand.u32 2147483647, %v138
    %v267 = vand.u32 2147483647, %v139
    %v268 = vand.u32 2147483647, %v140
    %v269 = vand.u32 2147483647, %v141
    %v270 = vand.u32 2147483647, %v142
    %v271 = vand.u32 2147483647, %v143
    %v272 = vand.u32 2147483647, %v144
    %v273 = vand.u32 2147483647, %v145
    %v274 = vand.u32 2147483647, %v146
    %v275 = vand.u32 2147483647, %v147
    %v276 = vand.u32 2147483647, %v148
    %v277 = vand.u32 2147483647, %v149
    %v278 = vand.u32 2147483647, %v150
    %v279 = vand.u32 2147483647, %v151
    %v280 = vand.u32 2147483647, %v152
    %v281 = vand.u32 2147483647, %v153
    %v282 = vand.u32 2147483647, %v154
    %v283 = vand.u32 2147483647, %v155
    %v284 = vand.u32 2147483647, %v156
    %v285 = vand.u32 2147483647, %v157
    %v286 = vand.u32 2147483647, %v158
    %v287 = vand.u32 2147483647, %v159
    %v288 = vand.u32 2147483647, %v160
    %v289 = vand.u32 2147483647, %v161
    %v290 = vand.u32 2147483647, %v162
    %v291 = vand.u32 2147483647, %v163
    %v292 = vand.u32 2147483647, %v164
    %v293 = vand.u32 2147483647, %v165
    %v294 = vand.u32 2147483647, %v166
    %v295 = vand.u32 2147483647, %v167
    %v296 = vand.u32 2147483647, %v168
    %v297 = vand.u32 2147483647, %v169
    %v298 = vand.u32 2147483647, %v170
    %v299 = vand.u32 2147483647, %v171
    %v300 = vand.u32 2147483647, %v172
    %v301 = vand.u32 2147483647, %v173
    %v302 = vand.u32 2147483647, %v174
    %v303 = vand.u32 2147483647, %v175
    %v304 = vand.u32 2147483647, %v176
    %v305 = vand.u32 2147483647, %v177
    %v306 = vand.u32 2147483647, %v178
    %v307 = vand.u32 2147483647, %v179
    %v308 = vand.u32 2147483647, %v180
    %v309 = vand.u32 2147483647, %v181
    %v310 = vand.u32 2147483647, %v182
    %v311 = vand.u32 2147483647, %v183
    %v312 = vand.u32 2147483647, %v184
    %v313 = vand.u32 2147483647, %v185
    %v314 = vsub.f32 0.0, %v186
    %v315 = vsub.f32 0.0, %v187
    %v316 = vsub.f32 0.0, %v188
    %v317 = vsub.f32 0.0, %v189
    %v318 = vsub.f32 0.0, %v190
    %v319 = vsub.f32 0.0, %v191
    %v320 = vsub.f32 0.0, %v192
    %v321 = vsub.f32 0.0, %v193
    %v322 = vsub.f32 0.0, %v194
    %v323 = vsub.f32 0.0, %v195
    %v324 = vsub.f32 0.0, %v196
    %v325 = vsub.f32 0.0, %v197
    %v326 = vsub.f32 0.0, %v198
    %v327 = vsub.f32 0.0, %v199
    %v328 = vsub.f32 0.0, %v200
    %v329 = vsub.f32 0.0, %v201
    %v330 = vsub.f32 0.0, %v202
    %v331 = vsub.f32 0.0, %v203
    %v332 = vsub.f32 0.0, %v204
    %v333 = vsub.f32 0.0, %v205
    %v334 = vsub.f32 0.0, %v206
    %v335 = vsub.f32 0.0, %v207
    %v336 = vsub.f32 0.0, %v208
    %v337 = vsub.f32 0.0, %v209
    %v338 = vsub.f32 0.0, %v210
    %v339 = vsub.f32 0.0, %v211
    %v340 = vsub.f32 0.0, %v212
    %v341 = vsub.f32 0.0, %v213
    %v342 = vsub.f32 0.0, %v214
    %v343 = vsub.f32 0.0, %v215
    %v344 = vsub.f32 0.0, %v216
    %v345 = vsub.f32 0.0, %v217
    %v346 = vsub.f32 0.0, %v218
    %v347 = vsub.f32 0.0, %v219
    %v348 = vsub.f32 0.0, %v220
    %v349 = vsub.f32 0.0, %v221
    %v350 = vsub.f32 0.0, %v222
    %v351 = vsub.f32 0.0, %v223
    %v352 = vsub.f32 0.0, %v224
    %v353 = vsub.f32 0.0, %v225
    %v354 = vsub.f32 0.0, %v226
    %v355 = vsub.f32 0.0, %v227
    %v356 = vsub.f32 0.0, %v228
    %v357 = vsub.f32 0.0, %v229
    %v358 = vsub.f32 0.0, %v230
    %v359 = vsub.f32 0.0, %v231
    %v360 = vsub.f32 0.0, %v232
    %v361 = vsub.f32 0.0, %v233
    %v362 = vsub.f32 0.0, %v234
    %v363 = vsub.f32 0.0, %v235
    %v364 = vsub.f32 0.0, %v236
    %v365 = vsub.f32 0.0, %v237
    %v366 = vsub.f32 0.0, %v238
    %v367 = vsub.f32 0.0, %v239
    %v368 = vsub.f32 0.0, %v240
    %v369 = vsub.f32 0.0, %v241
    %v370 = vsub.f32 0.0, %v242
    %v371 = vsub.f32 0.0, %v243
    %v372 = vsub.f32 0.0, %v244
    %v373 = vsub.f32 0.0, %v245
    %v374 = vsub.f32 0.0, %v246
    %v375 = vsub.f32 0.0, %v247
    %v376 = vsub.f32 0.0, %v248
    %v377 = vsub.f32 0.0, %v249
    %v378 = vsub.f32 0.0, %v250
    %v379 = vsub.f32 0.0, %v251
    %v380 = vsub.f32 0.0, %v252
    %v381 = vsub.f32 0.0, %v253
    %v382 = vsub.f32 0.0, %v254
    %v383 = vsub.f32 0.0, %v255
    %v384 = vsub.f32 0.0, %v256
    %v385 = vsub.f32 0.0, %v257
    %v386 = vsub.f32 0.0, %v258
    %v387 = vsub.f32 0.0, %v259
    %v388 = vsub.f32 0.0, %v260
    %v389 = vsub.f32 0.0, %v261
    %v390 = vsub.f32 0.0, %v262
    %v391 = vsub.f32 0.0, %v263
    %v392 = vsub.f32 0.0, %v264
    %v393 = vsub.f32 0.0, %v265
    %v394 = vsub.f32 0.0, %v266
    %v395 = vsub.f32 0.0, %v267
    %v396 = vsub.f32 0.0, %v268
    %v397 = vsub.f32 0.0, %v269
    %v398 = vsub.f32 0.0, %v270
    %v399 = vsub.f32 0.0, %v271
    %v400 = vsub.f32 0.0, %v272
    %v401 = vsub.f32 0.0, %v273
    %v402 = vsub.f32 0.0, %v274
    %v403 = vsub.f32 0.0, %v275
    %v404 = vsub.f32 0.0, %v276
    %v405 = vsub.f32 0.0, %v277
    %v406 = vsub.f32 0.0, %v278
    %v407 = vsub.f32 0.0, %v279
    %v408 = vsub.f32 0.0, %v280
    %v409 = vsub.f32 0.0, %v281
    %v410 = vsub.f32 0.0, %v282
    %v411 = vsub.f32 0.0, %v283
    %v412 = vsub.f32 0.0, %v284
    %v413 = vsub.f32 0.0, %v285
    %v414 = vsub.f32 0.0, %v286
    %v415 = vsub.f32 0.0, %v287
    %v416 = vsub.f32 0.0, %v288
    %v417 = vsub.f32 0.0, %v289
    %v418 = vsub.f32 0.0, %v290
    %v419 = vsub.f32 0.0, %v291
    %v420 = vsub.f32 0.0, %v292
    %v421 = vsub.f32 0.0, %v293
    %v422 = vsub.f32 0.0, %v294
    %v423 = vsub.f32 0.0, %v295
    %v424 = vsub.f32 0.0, %v296
    %v425 = vsub.f32 0.0, %v297
    %v426 = vsub.f32 0.0, %v298
    %v427 = vsub.f32 0.0, %v299
    %v428 = vsub.f32 0.0, %v300
    %v429 = vsub.f32 0.0, %v301
    %v430 = vsub.f32 0.0, %v302
    %v431 = vsub.f32 0.0, %v303
    %v432 = vsub.f32 0.0, %v304
    %v433 = vsub.f32 0.0, %v305
    %v434 = vsub.f32 0.0, %v306
    %v435 = vsub.f32 0.0, %v307
    %v436 = vsub.f32 0.0, %v308
    %v437 = vsub.f32 0.0, %v309
    %v438 = vsub.f32 0.0, %v310
    %v439 = vsub.f32 0.0, %v311
    %v440 = vsub.f32 0.0, %v312
    %v441 = vsub.f32 0.0, %v313
    %v442 = vmul.f32 %v314, 1.442695
    %v443 = vpow.pop %v442
    %v444 = vmul.f32 %v315, 1.442695
    %v445 = vpow.pop %v444
    %v446 = vmul.f32 %v316, 1.442695
    %v447 = vpow.pop %v446
    %v448 = vmul.f32 %v317, 1.442695
    %v449 = vpow.pop %v448
    %v450 = vmul.f32 %v318, 1.442695
    %v451 = vpow.pop %v450
    %v452 = vmul.f32 %v319, 1.442695
    %v453 = vpow.pop %v452
    %v454 = vmul.f32 %v320, 1.442695
    %v455 = vpow.pop %v454
    %v456 = vmul.f32 %v321, 1.442695
    %v457 = vpow.pop %v456
    %v458 = vmul.f32 %v322, 1.442695
    %v459 = vpow.pop %v458
    %v460 = vmul.f32 %v323, 1.442695
    %v461 = vpow.pop %v460
    %v462 = vmul.f32 %v324, 1.442695
    %v463 = vpow.pop %v462
    %v464 = vmul.f32 %v325, 1.442695
    %v465 = vpow.pop %v464
    %v466 = vmul.f32 %v326, 1.442695
    %v467 = vpow.pop %v466
    %v468 = vmul.f32 %v327, 1.442695
    %v469 = vpow.pop %v468
    %v470 = vmul.f32 %v328, 1.442695
    %v471 = vpow.pop %v470
    %v472 = vmul.f32 %v329, 1.442695
    %v473 = vpow.pop %v472
    %v474 = vmul.f32 %v330, 1.442695
    %v475 = vpow.pop %v474
    %v476 = vmul.f32 %v331, 1.442695
    %v477 = vpow.pop %v476
    %v478 = vmul.f32 %v332, 1.442695
    %v479 = vpow.pop %v478
    %v480 = vmul.f32 %v333, 1.442695
    %v481 = vpow.pop %v480
    %v482 = vmul.f32 %v334, 1.442695
    %v483 = vpow.pop %v482
    %v484 = vmul.f32 %v335, 1.442695
    %v485 = vpow.pop %v484
    %v486 = vmul.f32 %v336, 1.442695
    %v487 = vpow.pop %v486
    %v488 = vmul.f32 %v337, 1.442695
    %v489 = vpow.pop %v488
    %v490 = vmul.f32 %v338, 1.442695
    %v491 = vpow.pop %v490
    %v492 = vmul.f32 %v339, 1.442695
    %v493 = vpow.pop %v492
    %v494 = vmul.f32 %v340, 1.442695
    %v495 = vpow.pop %v494
    %v496 = vmul.f32 %v341, 1.442695
    %v497 = vpow.pop %v496
    %v498 = vmul.f32 %v342, 1.442695
    %v499 = vpow.pop %v498
    %v500 = vmul.f32 %v343, 1.442695
    %v501 = vpow.pop %v500
    %v502 = vmul.f32 %v344, 1.442695
    %v503 = vpow.pop %v502
    %v504 = vmul.f32 %v345, 1.442695
    %v505 = vpow.pop %v504
    %v506 = vmul.f32 %v346, 1.442695
    %v507 = vpow.pop %v506
    %v508 = vmul.f32 %v347, 1.442695
    %v509 = vpow.pop %v508
    %v510 = vmul.f32 %v348, 1.442695
    %v511 = vpow.pop %v510
    %v512 = vmul.f32 %v349, 1.442695
    %v513 = vpow.pop %v512
    %v514 = vmul.f32 %v350, 1.442695
    %v515 = vpow.pop %v514
    %v516 = vmul.f32 %v351, 1.442695
    %v517 = vpow.pop %v516
    %v518 = vmul.f32 %v352, 1.442695
    %v519 = vpow.pop %v518
    %v520 = vmul.f32 %v353, 1.442695
    %v521 = vpow.pop %v520
    %v522 = vmul.f32 %v354, 1.442695
    %v523 = vpow.pop %v522
    %v524 = vmul.f32 %v355, 1.442695
    %v525 = vpow.pop %v524
    %v526 = vmul.f32 %v356, 1.442695
    %v527 = vpow.pop %v526
    %v528 = vmul.f32 %v357, 1.442695
    %v529 = vpow.pop %v528
    %v530 = vmul.f32 %v358, 1.442695
    %v531 = vpow.pop %v530
    %v532 = vmul.f32 %v359, 1.442695
    %v533 = vpow.pop %v532
    %v534 = vmul.f32 %v360, 1.442695
    %v535 = vpow.pop %v534
    %v536 = vmul.f32 %v361, 1.442695
    %v537 = vpow.pop %v536
    %v538 = vmul.f32 %v362, 1.442695
    %v539 = vpow.pop %v538
    %v540 = vmul.f32 %v363, 1.442695
    %v541 = vpow.pop %v540
    %v542 = vmul.f32 %v364, 1.442695
    %v543 = vpow.pop %v542
    %v544 = vmul.f32 %v365, 1.442695
    %v545 = vpow.pop %v544
    %v546 = vmul.f32 %v366, 1.442695
    %v547 = vpow.pop %v546
    %v548 = vmul.f32 %v367, 1.442695
    %v549 = vpow.pop %v548
    %v550 = vmul.f32 %v368, 1.442695
    %v551 = vpow.pop %v550
    %v552 = vmul.f32 %v369, 1.442695
    %v553 = vpow.pop %v552
    %v554 = vmul.f32 %v370, 1.442695
    %v555 = vpow.pop %v554
    %v556 = vmul.f32 %v371, 1.442695
    %v557 = vpow.pop %v556
    %v558 = vmul.f32 %v372, 1.442695
    %v559 = vpow.pop %v558
    %v560 = vmul.f32 %v373, 1.442695
    %v561 = vpow.pop %v560
    %v562 = vmul.f32 %v374, 1.442695
    %v563 = vpow.pop %v562
    %v564 = vmul.f32 %v375, 1.442695
    %v565 = vpow.pop %v564
    %v566 = vmul.f32 %v376, 1.442695
    %v567 = vpow.pop %v566
    %v568 = vmul.f32 %v377, 1.442695
    %v569 = vpow.pop %v568
    %v570 = vmul.f32 %v378, 1.442695
    %v571 = vpow.pop %v570
    %v572 = vmul.f32 %v379, 1.442695
    %v573 = vpow.pop %v572
    %v574 = vmul.f32 %v380, 1.442695
    %v575 = vpow.pop %v574
    %v576 = vmul.f32 %v381, 1.442695
    %v577 = vpow.pop %v576
    %v578 = vmul.f32 %v382, 1.442695
    %v579 = vpow.pop %v578
    %v580 = vmul.f32 %v383, 1.442695
    %v581 = vpow.pop %v580
    %v582 = vmul.f32 %v384, 1.442695
    %v583 = vpow.pop %v582
    %v584 = vmul.f32 %v385, 1.442695
    %v585 = vpow.pop %v584
    %v586 = vmul.f32 %v386, 1.442695
    %v587 = vpow.pop %v586
    %v588 = vmul.f32 %v387, 1.442695
    %v589 = vpow.pop %v588
    %v590 = vmul.f32 %v388, 1.442695
    %v591 = vpow.pop %v590
    %v592 = vmul.f32 %v389, 1.442695
    %v593 = vpow.pop %v592
    %v594 = vmul.f32 %v390, 1.442695
    %v595 = vpow.pop %v594
    %v596 = vmul.f32 %v391, 1.442695
    %v597 = vpow.pop %v596
    %v598 = vmul.f32 %v392, 1.442695
    %v599 = vpow.pop %v598
    %v600 = vmul.f32 %v393, 1.442695
    %v601 = vpow.pop %v600
    %v602 = vmul.f32 %v394, 1.442695
    %v603 = vpow.pop %v602
    %v604 = vmul.f32 %v395, 1.442695
    %v605 = vpow.pop %v604
    %v606 = vmul.f32 %v396, 1.442695
    %v607 = vpow.pop %v606
    %v608 = vmul.f32 %v397, 1.442695
    %v609 = vpow.pop %v608
    %v610 = vmul.f32 %v398, 1.442695
    %v611 = vpow.pop %v610
    %v612 = vmul.f32 %v399, 1.442695
    %v613 = vpow.pop %v612
    %v614 = vmul.f32 %v400, 1.442695
    %v615 = vpow.pop %v614
    %v616 = vmul.f32 %v401, 1.442695
    %v617 = vpow.pop %v616
    %v618 = vmul.f32 %v402, 1.442695
    %v619 = vpow.pop %v618
    %v620 = vmul.f32 %v403, 1.442695
    %v621 = vpow.pop %v620
    %v622 = vmul.f32 %v404, 1.442695
    %v623 = vpow.pop %v622
    %v624 = vmul.f32 %v405, 1.442695
    %v625 = vpow.pop %v624
    %v626 = vmul.f32 %v406, 1.442695
    %v627 = vpow.pop %v626
    %v628 = vmul.f32 %v407, 1.442695
    %v629 = vpow.pop %v628
    %v630 = vmul.f32 %v408, 1.442695
    %v631 = vpow.pop %v630
    %v632 = vmul.f32 %v409, 1.442695
    %v633 = vpow.pop %v632
    %v634 = vmul.f32 %v410, 1.442695
    %v635 = vpow.pop %v634
    %v636 = vmul.f32 %v411, 1.442695
    %v637 = vpow.pop %v636
    %v638 = vmul.f32 %v412, 1.442695
    %v639 = vpow.pop %v638
    %v640 = vmul.f32 %v413, 1.442695
    %v641 = vpow.pop %v640
    %v642 = vmul.f32 %v414, 1.442695
    %v643 = vpow.pop %v642
    %v644 = vmul.f32 %v415, 1.442695
    %v645 = vpow.pop %v644
    %v646 = vmul.f32 %v416, 1.442695
    %v647 = vpow.pop %v646
    %v648 = vmul.f32 %v417, 1.442695
    %v649 = vpow.pop %v648
    %v650 = vmul.f32 %v418, 1.442695
    %v651 = vpow.pop %v650
    %v652 = vmul.f32 %v419, 1.442695
    %v653 = vpow.pop %v652
    %v654 = vmul.f32 %v420, 1.442695
    %v655 = vpow.pop %v654
    %v656 = vmul.f32 %v421, 1.442695
    %v657 = vpow.pop %v656
    %v658 = vmul.f32 %v422, 1.442695
    %v659 = vpow.pop %v658
    %v660 = vmul.f32 %v423, 1.442695
    %v661 = vpow.pop %v660
    %v662 = vmul.f32 %v424, 1.442695
    %v663 = vpow.pop %v662
    %v664 = vmul.f32 %v425, 1.442695
    %v665 = vpow.pop %v664
    %v666 = vmul.f32 %v426, 1.442695
    %v667 = vpow.pop %v666
    %v668 = vmul.f32 %v427, 1.442695
    %v669 = vpow.pop %v668
    %v670 = vmul.f32 %v428, 1.442695
    %v671 = vpow.pop %v670
    %v672 = vmul.f32 %v429, 1.442695
    %v673 = vpow.pop %v672
    %v674 = vmul.f32 %v430, 1.442695
    %v675 = vpow.pop %v674
    %v676 = vmul.f32 %v431, 1.442695
    %v677 = vpow.pop %v676
    %v678 = vmul.f32 %v432, 1.442695
    %v679 = vpow.pop %v678
    %v680 = vmul.f32 %v433, 1.442695
    %v681 = vpow.pop %v680
    %v682 = vmul.f32 %v434, 1.442695
    %v683 = vpow.pop %v682
    %v684 = vmul.f32 %v435, 1.442695
    %v685 = vpow.pop %v684
    %v686 = vmul.f32 %v436, 1.442695
    %v687 = vpow.pop %v686
    %v688 = vmul.f32 %v437, 1.442695
    %v689 = vpow.pop %v688
    %v690 = vmul.f32 %v438, 1.442695
    %v691 = vpow.pop %v690
    %v692 = vmul.f32 %v439, 1.442695
    %v693 = vpow.pop %v692
    %v694 = vmul.f32 %v440, 1.442695
    %v695 = vpow.pop %v694
    %v696 = vmul.f32 %v441, 1.442695
    %v697 = vpow.pop %v696
    %v698 = vadd.f32 %v443, 1.0
    %v699 = vadd.f32 %v445, 1.0
    %v700 = vadd.f32 %v447, 1.0
    %v701 = vadd.f32 %v449, 1.0
    %v702 = vadd.f32 %v451, 1.0
    %v703 = vadd.f32 %v453, 1.0
    %v704 = vadd.f32 %v455, 1.0
    %v705 = vadd.f32 %v457, 1.0
    %v706 = vadd.f32 %v459, 1.0
    %v707 = vadd.f32 %v461, 1.0
    %v708 = vadd.f32 %v463, 1.0
    %v709 = vadd.f32 %v465, 1.0
    %v710 = vadd.f32 %v467, 1.0
    %v711 = vadd.f32 %v469, 1.0
    %v712 = vadd.f32 %v471, 1.0
    %v713 = vadd.f32 %v473, 1.0
    %v714 = vadd.f32 %v475, 1.0
    %v715 = vadd.f32 %v477, 1.0
    %v716 = vadd.f32 %v479, 1.0
    %v717 = vadd.f32 %v481, 1.0
    %v718 = vadd.f32 %v483, 1.0
    %v719 = vadd.f32 %v485, 1.0
    %v720 = vadd.f32 %v487, 1.0
    %v721 = vadd.f32 %v489, 1.0
    %v722 = vadd.f32 %v491, 1.0
    %v723 = vadd.f32 %v493, 1.0
    %v724 = vadd.f32 %v495, 1.0
    %v725 = vadd.f32 %v497, 1.0
    %v726 = vadd.f32 %v499, 1.0
    %v727 = vadd.f32 %v501, 1.0
    %v728 = vadd.f32 %v503, 1.0
    %v729 = vadd.f32 %v505, 1.0
    %v730 = vadd.f32 %v507, 1.0
    %v731 = vadd.f32 %v509, 1.0
    %v732 = vadd.f32 %v511, 1.0
    %v733 = vadd.f32 %v513, 1.0
    %v734 = vadd.f32 %v515, 1.0
    %v735 = vadd.f32 %v517, 1.0
    %v736 = vadd.f32 %v519, 1.0
    %v737 = vadd.f32 %v521, 1.0
    %v738 = vadd.f32 %v523, 1.0
    %v739 = vadd.f32 %v525, 1.0
    %v740 = vadd.f32 %v527, 1.0
    %v741 = vadd.f32 %v529, 1.0
    %v742 = vadd.f32 %v531, 1.0
    %v743 = vadd.f32 %v533, 1.0
    %v744 = vadd.f32 %v535, 1.0
    %v745 = vadd.f32 %v537, 1.0
    %v746 = vadd.f32 %v539, 1.0
    %v747 = vadd.f32 %v541, 1.0
    %v748 = vadd.f32 %v543, 1.0
    %v749 = vadd.f32 %v545, 1.0
    %v750 = vadd.f32 %v547, 1.0
    %v751 = vadd.f32 %v549, 1.0
    %v752 = vadd.f32 %v551, 1.0
    %v753 = vadd.f32 %v553, 1.0
    %v754 = vadd.f32 %v555, 1.0
    %v755 = vadd.f32 %v557, 1.0
    %v756 = vadd.f32 %v559, 1.0
    %v757 = vadd.f32 %v561, 1.0
    %v758 = vadd.f32 %v563, 1.0
    %v759 = vadd.f32 %v565, 1.0
    %v760 = vadd.f32 %v567, 1.0
    %v761 = vadd.f32 %v569, 1.0
    %v762 = vadd.f32 %v571, 1.0
    %v763 = vadd.f32 %v573, 1.0
    %v764 = vadd.f32 %v575, 1.0
    %v765 = vadd.f32 %v577, 1.0
    %v766 = vadd.f32 %v579, 1.0
    %v767 = vadd.f32 %v581, 1.0
    %v768 = vadd.f32 %v583, 1.0
    %v769 = vadd.f32 %v585, 1.0
    %v770 = vadd.f32 %v587, 1.0
    %v771 = vadd.f32 %v589, 1.0
    %v772 = vadd.f32 %v591, 1.0
    %v773 = vadd.f32 %v593, 1.0
    %v774 = vadd.f32 %v595, 1.0
    %v775 = vadd.f32 %v597, 1.0
    %v776 = vadd.f32 %v599, 1.0
    %v777 = vadd.f32 %v601, 1.0
    %v778 = vadd.f32 %v603, 1.0
    %v779 = vadd.f32 %v605, 1.0
    %v780 = vadd.f32 %v607, 1.0
    %v781 = vadd.f32 %v609, 1.0
    %v782 = vadd.f32 %v611, 1.0
    %v783 = vadd.f32 %v613, 1.0
    %v784 = vadd.f32 %v615, 1.0
    %v785 = vadd.f32 %v617, 1.0
    %v786 = vadd.f32 %v619, 1.0
    %v787 = vadd.f32 %v621, 1.0
    %v788 = vadd.f32 %v623, 1.0
    %v789 = vadd.f32 %v625, 1.0
    %v790 = vadd.f32 %v627, 1.0
    %v791 = vadd.f32 %v629, 1.0
    %v792 = vadd.f32 %v631, 1.0
    %v793 = vadd.f32 %v633, 1.0
    %v794 = vadd.f32 %v635, 1.0
    %v795 = vadd.f32 %v637, 1.0
    %v796 = vadd.f32 %v639, 1.0
    %v797 = vadd.f32 %v641, 1.0
    %v798 = vadd.f32 %v643, 1.0
    %v799 = vadd.f32 %v645, 1.0
    %v800 = vadd.f32 %v647, 1.0
    %v801 = vadd.f32 %v649, 1.0
    %v802 = vadd.f32 %v651, 1.0
    %v803 = vadd.f32 %v653, 1.0
    %v804 = vadd.f32 %v655, 1.0
    %v805 = vadd.f32 %v657, 1.0
    %v806 = vadd.f32 %v659, 1.0
    %v807 = vadd.f32 %v661, 1.0
    %v808 = vadd.f32 %v663, 1.0
    %v809 = vadd.f32 %v665, 1.0
    %v810 = vadd.f32 %v667, 1.0
    %v811 = vadd.f32 %v669, 1.0
    %v812 = vadd.f32 %v671, 1.0
    %v813 = vadd.f32 %v673, 1.0
    %v814 = vadd.f32 %v675, 1.0
    %v815 = vadd.f32 %v677, 1.0
    %v816 = vadd.f32 %v679, 1.0
    %v817 = vadd.f32 %v681, 1.0
    %v818 = vadd.f32 %v683, 1.0
    %v819 = vadd.f32 %v685, 1.0
    %v820 = vadd.f32 %v687, 1.0
    %v821 = vadd.f32 %v689, 1.0
    %v822 = vadd.f32 %v691, 1.0
    %v823 = vadd.f32 %v693, 1.0
    %v824 = vadd.f32 %v695, 1.0
    %v825 = vadd.f32 %v697, 1.0
    %v826 = vlog2.pop %v698
    %v827 = vmul.f32 %v826, 0.6931472
    %v828 = vlog2.pop %v699
    %v829 = vmul.f32 %v828, 0.6931472
    %v830 = vlog2.pop %v700
    %v831 = vmul.f32 %v830, 0.6931472
    %v832 = vlog2.pop %v701
    %v833 = vmul.f32 %v832, 0.6931472
    %v834 = vlog2.pop %v702
    %v835 = vmul.f32 %v834, 0.6931472
    %v836 = vlog2.pop %v703
    %v837 = vmul.f32 %v836, 0.6931472
    %v838 = vlog2.pop %v704
    %v839 = vmul.f32 %v838, 0.6931472
    %v840 = vlog2.pop %v705
    %v841 = vmul.f32 %v840, 0.6931472
    %v842 = vlog2.pop %v706
    %v843 = vmul.f32 %v842, 0.6931472
    %v844 = vlog2.pop %v707
    %v845 = vmul.f32 %v844, 0.6931472
    %v846 = vlog2.pop %v708
    %v847 = vmul.f32 %v846, 0.6931472
    %v848 = vlog2.pop %v709
    %v849 = vmul.f32 %v848, 0.6931472
    %v850 = vlog2.pop %v710
    %v851 = vmul.f32 %v850, 0.6931472
    %v852 = vlog2.pop %v711
    %v853 = vmul.f32 %v852, 0.6931472
    %v854 = vlog2.pop %v712
    %v855 = vmul.f32 %v854, 0.6931472
    %v856 = vlog2.pop %v713
    %v857 = vmul.f32 %v856, 0.6931472
    %v858 = vlog2.pop %v714
    %v859 = vmul.f32 %v858, 0.6931472
    %v860 = vlog2.pop %v715
    %v861 = vmul.f32 %v860, 0.6931472
    %v862 = vlog2.pop %v716
    %v863 = vmul.f32 %v862, 0.6931472
    %v864 = vlog2.pop %v717
    %v865 = vmul.f32 %v864, 0.6931472
    %v866 = vlog2.pop %v718
    %v867 = vmul.f32 %v866, 0.6931472
    %v868 = vlog2.pop %v719
    %v869 = vmul.f32 %v868, 0.6931472
    %v870 = vlog2.pop %v720
    %v871 = vmul.f32 %v870, 0.6931472
    %v872 = vlog2.pop %v721
    %v873 = vmul.f32 %v872, 0.6931472
    %v874 = vlog2.pop %v722
    %v875 = vmul.f32 %v874, 0.6931472
    %v876 = vlog2.pop %v723
    %v877 = vmul.f32 %v876, 0.6931472
    %v878 = vlog2.pop %v724
    %v879 = vmul.f32 %v878, 0.6931472
    %v880 = vlog2.pop %v725
    %v881 = vmul.f32 %v880, 0.6931472
    %v882 = vlog2.pop %v726
    %v883 = vmul.f32 %v882, 0.6931472
    %v884 = vlog2.pop %v727
    %v885 = vmul.f32 %v884, 0.6931472
    %v886 = vlog2.pop %v728
    %v887 = vmul.f32 %v886, 0.6931472
    %v888 = vlog2.pop %v729
    %v889 = vmul.f32 %v888, 0.6931472
    %v890 = vlog2.pop %v730
    %v891 = vmul.f32 %v890, 0.6931472
    %v892 = vlog2.pop %v731
    %v893 = vmul.f32 %v892, 0.6931472
    %v894 = vlog2.pop %v732
    %v895 = vmul.f32 %v894, 0.6931472
    %v896 = vlog2.pop %v733
    %v897 = vmul.f32 %v896, 0.6931472
    %v898 = vlog2.pop %v734
    %v899 = vmul.f32 %v898, 0.6931472
    %v900 = vlog2.pop %v735
    %v901 = vmul.f32 %v900, 0.6931472
    %v902 = vlog2.pop %v736
    %v903 = vmul.f32 %v902, 0.6931472
    %v904 = vlog2.pop %v737
    %v905 = vmul.f32 %v904, 0.6931472
    %v906 = vlog2.pop %v738
    %v907 = vmul.f32 %v906, 0.6931472
    %v908 = vlog2.pop %v739
    %v909 = vmul.f32 %v908, 0.6931472
    %v910 = vlog2.pop %v740
    %v911 = vmul.f32 %v910, 0.6931472
    %v912 = vlog2.pop %v741
    %v913 = vmul.f32 %v912, 0.6931472
    %v914 = vlog2.pop %v742
    %v915 = vmul.f32 %v914, 0.6931472
    %v916 = vlog2.pop %v743
    %v917 = vmul.f32 %v916, 0.6931472
    %v918 = vlog2.pop %v744
    %v919 = vmul.f32 %v918, 0.6931472
    %v920 = vlog2.pop %v745
    %v921 = vmul.f32 %v920, 0.6931472
    %v922 = vlog2.pop %v746
    %v923 = vmul.f32 %v922, 0.6931472
    %v924 = vlog2.pop %v747
    %v925 = vmul.f32 %v924, 0.6931472
    %v926 = vlog2.pop %v748
    %v927 = vmul.f32 %v926, 0.6931472
    %v928 = vlog2.pop %v749
    %v929 = vmul.f32 %v928, 0.6931472
    %v930 = vlog2.pop %v750
    %v931 = vmul.f32 %v930, 0.6931472
    %v932 = vlog2.pop %v751
    %v933 = vmul.f32 %v932, 0.6931472
    %v934 = vlog2.pop %v752
    %v935 = vmul.f32 %v934, 0.6931472
    %v936 = vlog2.pop %v753
    %v937 = vmul.f32 %v936, 0.6931472
    %v938 = vlog2.pop %v754
    %v939 = vmul.f32 %v938, 0.6931472
    %v940 = vlog2.pop %v755
    %v941 = vmul.f32 %v940, 0.6931472
    %v942 = vlog2.pop %v756
    %v943 = vmul.f32 %v942, 0.6931472
    %v944 = vlog2.pop %v757
    %v945 = vmul.f32 %v944, 0.6931472
    %v946 = vlog2.pop %v758
    %v947 = vmul.f32 %v946, 0.6931472
    %v948 = vlog2.pop %v759
    %v949 = vmul.f32 %v948, 0.6931472
    %v950 = vlog2.pop %v760
    %v951 = vmul.f32 %v950, 0.6931472
    %v952 = vlog2.pop %v761
    %v953 = vmul.f32 %v952, 0.6931472
    %v954 = vlog2.pop %v762
    %v955 = vmul.f32 %v954, 0.6931472
    %v956 = vlog2.pop %v763
    %v957 = vmul.f32 %v956, 0.6931472
    %v958 = vlog2.pop %v764
    %v959 = vmul.f32 %v958, 0.6931472
    %v960 = vlog2.pop %v765
    %v961 = vmul.f32 %v960, 0.6931472
    %v962 = vlog2.pop %v766
    %v963 = vmul.f32 %v962, 0.6931472
    %v964 = vlog2.pop %v767
    %v965 = vmul.f32 %v964, 0.6931472
    %v966 = vlog2.pop %v768
    %v967 = vmul.f32 %v966, 0.6931472
    %v968 = vlog2.pop %v769
    %v969 = vmul.f32 %v968, 0.6931472
    %v970 = vlog2.pop %v770
    %v971 = vmul.f32 %v970, 0.6931472
    %v972 = vlog2.pop %v771
    %v973 = vmul.f32 %v972, 0.6931472
    %v974 = vlog2.pop %v772
    %v975 = vmul.f32 %v974, 0.6931472
    %v976 = vlog2.pop %v773
    %v977 = vmul.f32 %v976, 0.6931472
    %v978 = vlog2.pop %v774
    %v979 = vmul.f32 %v978, 0.6931472
    %v980 = vlog2.pop %v775
    %v981 = vmul.f32 %v980, 0.6931472
    %v982 = vlog2.pop %v776
    %v983 = vmul.f32 %v982, 0.6931472
    %v984 = vlog2.pop %v777
    %v985 = vmul.f32 %v984, 0.6931472
    %v986 = vlog2.pop %v778
    %v987 = vmul.f32 %v986, 0.6931472
    %v988 = vlog2.pop %v779
    %v989 = vmul.f32 %v988, 0.6931472
    %v990 = vlog2.pop %v780
    %v991 = vmul.f32 %v990, 0.6931472
    %v992 = vlog2.pop %v781
    %v993 = vmul.f32 %v992, 0.6931472
    %v994 = vlog2.pop %v782
    %v995 = vmul.f32 %v994, 0.6931472
    %v996 = vlog2.pop %v783
    %v997 = vmul.f32 %v996, 0.6931472
    %v998 = vlog2.pop %v784
    %v999 = vmul.f32 %v998, 0.6931472
    %v1000 = vlog2.pop %v785
    %v1001 = vmul.f32 %v1000, 0.6931472
    %v1002 = vlog2.pop %v786
    %v1003 = vmul.f32 %v1002, 0.6931472
    %v1004 = vlog2.pop %v787
    %v1005 = vmul.f32 %v1004, 0.6931472
    %v1006 = vlog2.pop %v788
    %v1007 = vmul.f32 %v1006, 0.6931472
    %v1008 = vlog2.pop %v789
    %v1009 = vmul.f32 %v1008, 0.6931472
    %v1010 = vlog2.pop %v790
    %v1011 = vmul.f32 %v1010, 0.6931472
    %v1012 = vlog2.pop %v791
    %v1013 = vmul.f32 %v1012, 0.6931472
    %v1014 = vlog2.pop %v792
    %v1015 = vmul.f32 %v1014, 0.6931472
    %v1016 = vlog2.pop %v793
    %v1017 = vmul.f32 %v1016, 0.6931472
    %v1018 = vlog2.pop %v794
    %v1019 = vmul.f32 %v1018, 0.6931472
    %v1020 = vlog2.pop %v795
    %v1021 = vmul.f32 %v1020, 0.6931472
    %v1022 = vlog2.pop %v796
    %v1023 = vmul.f32 %v1022, 0.6931472
    %v1024 = vlog2.pop %v797
    %v1025 = vmul.f32 %v1024, 0.6931472
    %v1026 = vlog2.pop %v798
    %v1027 = vmul.f32 %v1026, 0.6931472
    %v1028 = vlog2.pop %v799
    %v1029 = vmul.f32 %v1028, 0.6931472
    %v1030 = vlog2.pop %v800
    %v1031 = vmul.f32 %v1030, 0.6931472
    %v1032 = vlog2.pop %v801
    %v1033 = vmul.f32 %v1032, 0.6931472
    %v1034 = vlog2.pop %v802
    %v1035 = vmul.f32 %v1034, 0.6931472
    %v1036 = vlog2.pop %v803
    %v1037 = vmul.f32 %v1036, 0.6931472
    %v1038 = vlog2.pop %v804
    %v1039 = vmul.f32 %v1038, 0.6931472
    %v1040 = vlog2.pop %v805
    %v1041 = vmul.f32 %v1040, 0.6931472
    %v1042 = vlog2.pop %v806
    %v1043 = vmul.f32 %v1042, 0.6931472
    %v1044 = vlog2.pop %v807
    %v1045 = vmul.f32 %v1044, 0.6931472
    %v1046 = vlog2.pop %v808
    %v1047 = vmul.f32 %v1046, 0.6931472
    %v1048 = vlog2.pop %v809
    %v1049 = vmul.f32 %v1048, 0.6931472
    %v1050 = vlog2.pop %v810
    %v1051 = vmul.f32 %v1050, 0.6931472
    %v1052 = vlog2.pop %v811
    %v1053 = vmul.f32 %v1052, 0.6931472
    %v1054 = vlog2.pop %v812
    %v1055 = vmul.f32 %v1054, 0.6931472
    %v1056 = vlog2.pop %v813
    %v1057 = vmul.f32 %v1056, 0.6931472
    %v1058 = vlog2.pop %v814
    %v1059 = vmul.f32 %v1058, 0.6931472
    %v1060 = vlog2.pop %v815
    %v1061 = vmul.f32 %v1060, 0.6931472
    %v1062 = vlog2.pop %v816
    %v1063 = vmul.f32 %v1062, 0.6931472
    %v1064 = vlog2.pop %v817
    %v1065 = vmul.f32 %v1064, 0.6931472
    %v1066 = vlog2.pop %v818
    %v1067 = vmul.f32 %v1066, 0.6931472
    %v1068 = vlog2.pop %v819
    %v1069 = vmul.f32 %v1068, 0.6931472
    %v1070 = vlog2.pop %v820
    %v1071 = vmul.f32 %v1070, 0.6931472
    %v1072 = vlog2.pop %v821
    %v1073 = vmul.f32 %v1072, 0.6931472
    %v1074 = vlog2.pop %v822
    %v1075 = vmul.f32 %v1074, 0.6931472
    %v1076 = vlog2.pop %v823
    %v1077 = vmul.f32 %v1076, 0.6931472
    %v1078 = vlog2.pop %v824
    %v1079 = vmul.f32 %v1078, 0.6931472
    %v1080 = vlog2.pop %v825
    %v1081 = vmul.f32 %v1080, 0.6931472
    %v1082 = vmax.f32 %v58, 0.0
    %v1083 = vmax.f32 %v59, 0.0
    %v1084 = vmax.f32 %v60, 0.0
    %v1085 = vmax.f32 %v61, 0.0
    %v1086 = vmax.f32 %v62, 0.0
    %v1087 = vmax.f32 %v63, 0.0
    %v1088 = vmax.f32 %v64, 0.0
    %v1089 = vmax.f32 %v65, 0.0
    %v1090 = vmax.f32 %v66, 0.0
    %v1091 = vmax.f32 %v67, 0.0
    %v1092 = vmax.f32 %v68, 0.0
    %v1093 = vmax.f32 %v69, 0.0
    %v1094 = vmax.f32 %v70, 0.0
    %v1095 = vmax.f32 %v71, 0.0
    %v1096 = vmax.f32 %v72, 0.0
    %v1097 = vmax.f32 %v73, 0.0
    %v1098 = vmax.f32 %v74, 0.0
    %v1099 = vmax.f32 %v75, 0.0
    %v1100 = vmax.f32 %v76, 0.0
    %v1101 = vmax.f32 %v77, 0.0
    %v1102 = vmax.f32 %v78, 0.0
    %v1103 = vmax.f32 %v79, 0.0
    %v1104 = vmax.f32 %v80, 0.0
    %v1105 = vmax.f32 %v81, 0.0
    %v1106 = vmax.f32 %v82, 0.0
    %v1107 = vmax.f32 %v83, 0.0
    %v1108 = vmax.f32 %v84, 0.0
    %v1109 = vmax.f32 %v85, 0.0
    %v1110 = vmax.f32 %v86, 0.0
    %v1111 = vmax.f32 %v87, 0.0
    %v1112 = vmax.f32 %v88, 0.0
    %v1113 = vmax.f32 %v89, 0.0
    %v1114 = vmax.f32 %v90, 0.0
    %v1115 = vmax.f32 %v91, 0.0
    %v1116 = vmax.f32 %v92, 0.0
    %v1117 = vmax.f32 %v93, 0.0
    %v1118 = vmax.f32 %v94, 0.0
    %v1119 = vmax.f32 %v95, 0.0
    %v1120 = vmax.f32 %v96, 0.0
    %v1121 = vmax.f32 %v97, 0.0
    %v1122 = vmax.f32 %v98, 0.0
    %v1123 = vmax.f32 %v99, 0.0
    %v1124 = vmax.f32 %v100, 0.0
    %v1125 = vmax.f32 %v101, 0.0
    %v1126 = vmax.f32 %v102, 0.0
    %v1127 = vmax.f32 %v103, 0.0
    %v1128 = vmax.f32 %v104, 0.0
    %v1129 = vmax.f32 %v105, 0.0
    %v1130 = vmax.f32 %v106, 0.0
    %v1131 = vmax.f32 %v107, 0.0
    %v1132 = vmax.f32 %v108, 0.0
    %v1133 = vmax.f32 %v109, 0.0
    %v1134 = vmax.f32 %v110, 0.0
    %v1135 = vmax.f32 %v111, 0.0
    %v1136 = vmax.f32 %v112, 0.0
    %v1137 = vmax.f32 %v113, 0.0
    %v1138 = vmax.f32 %v114, 0.0
    %v1139 = vmax.f32 %v115, 0.0
    %v1140 = vmax.f32 %v116, 0.0
    %v1141 = vmax.f32 %v117, 0.0
    %v1142 = vmax.f32 %v118, 0.0
    %v1143 = vmax.f32 %v119, 0.0
    %v1144 = vmax.f32 %v120, 0.0
    %v1145 = vmax.f32 %v121, 0.0
    %v1146 = vmax.f32 %v122, 0.0
    %v1147 = vmax.f32 %v123, 0.0
    %v1148 = vmax.f32 %v124, 0.0
    %v1149 = vmax.f32 %v125, 0.0
    %v1150 = vmax.f32 %v126, 0.0
    %v1151 = vmax.f32 %v127, 0.0
    %v1152 = vmax.f32 %v128, 0.0
    %v1153 = vmax.f32 %v129, 0.0
    %v1154 = vmax.f32 %v130, 0.0
    %v1155 = vmax.f32 %v131, 0.0
    %v1156 = vmax.f32 %v132, 0.0
    %v1157 = vmax.f32 %v133, 0.0
    %v1158 = vmax.f32 %v134, 0.0
    %v1159 = vmax.f32 %v135, 0.0
    %v1160 = vmax.f32 %v136, 0.0
    %v1161 = vmax.f32 %v137, 0.0
    %v1162 = vmax.f32 %v138, 0.0
    %v1163 = vmax.f32 %v139, 0.0
    %v1164 = vmax.f32 %v140, 0.0
    %v1165 = vmax.f32 %v141, 0.0
    %v1166 = vmax.f32 %v142, 0.0
    %v1167 = vmax.f32 %v143, 0.0
    %v1168 = vmax.f32 %v144, 0.0
    %v1169 = vmax.f32 %v145, 0.0
    %v1170 = vmax.f32 %v146, 0.0
    %v1171 = vmax.f32 %v147, 0.0
    %v1172 = vmax.f32 %v148, 0.0
    %v1173 = vmax.f32 %v149, 0.0
    %v1174 = vmax.f32 %v150, 0.0
    %v1175 = vmax.f32 %v151, 0.0
    %v1176 = vmax.f32 %v152, 0.0
    %v1177 = vmax.f32 %v153, 0.0
    %v1178 = vmax.f32 %v154, 0.0
    %v1179 = vmax.f32 %v155, 0.0
    %v1180 = vmax.f32 %v156, 0.0
    %v1181 = vmax.f32 %v157, 0.0
    %v1182 = vmax.f32 %v158, 0.0
    %v1183 = vmax.f32 %v159, 0.0
    %v1184 = vmax.f32 %v160, 0.0
    %v1185 = vmax.f32 %v161, 0.0
    %v1186 = vmax.f32 %v162, 0.0
    %v1187 = vmax.f32 %v163, 0.0
    %v1188 = vmax.f32 %v164, 0.0
    %v1189 = vmax.f32 %v165, 0.0
    %v1190 = vmax.f32 %v166, 0.0
    %v1191 = vmax.f32 %v167, 0.0
    %v1192 = vmax.f32 %v168, 0.0
    %v1193 = vmax.f32 %v169, 0.0
    %v1194 = vmax.f32 %v170, 0.0
    %v1195 = vmax.f32 %v171, 0.0
    %v1196 = vmax.f32 %v172, 0.0
    %v1197 = vmax.f32 %v173, 0.0
    %v1198 = vmax.f32 %v174, 0.0
    %v1199 = vmax.f32 %v175, 0.0
    %v1200 = vmax.f32 %v176, 0.0
    %v1201 = vmax.f32 %v177, 0.0
    %v1202 = vmax.f32 %v178, 0.0
    %v1203 = vmax.f32 %v179, 0.0
    %v1204 = vmax.f32 %v180, 0.0
    %v1205 = vmax.f32 %v181, 0.0
    %v1206 = vmax.f32 %v182, 0.0
    %v1207 = vmax.f32 %v183, 0.0
    %v1208 = vmax.f32 %v184, 0.0
    %v1209 = vmax.f32 %v185, 0.0
    %v1210 = vmul.f32 %v58, 0.9
    %v1211 = vmul.f32 %v59, 0.9
    %v1212 = vmul.f32 %v60, 0.9
    %v1213 = vmul.f32 %v61, 0.9
    %v1214 = vmul.f32 %v62, 0.9
    %v1215 = vmul.f32 %v63, 0.9
    %v1216 = vmul.f32 %v64, 0.9
    %v1217 = vmul.f32 %v65, 0.9
    %v1218 = vmul.f32 %v66, 0.9
    %v1219 = vmul.f32 %v67, 0.9
    %v1220 = vmul.f32 %v68, 0.9
    %v1221 = vmul.f32 %v69, 0.9
    %v1222 = vmul.f32 %v70, 0.9
    %v1223 = vmul.f32 %v71, 0.9
    %v1224 = vmul.f32 %v72, 0.9
    %v1225 = vmul.f32 %v73, 0.9
    %v1226 = vmul.f32 %v74, 0.9
    %v1227 = vmul.f32 %v75, 0.9
    %v1228 = vmul.f32 %v76, 0.9
    %v1229 = vmul.f32 %v77, 0.9
    %v1230 = vmul.f32 %v78, 0.9
    %v1231 = vmul.f32 %v79, 0.9
    %v1232 = vmul.f32 %v80, 0.9
    %v1233 = vmul.f32 %v81, 0.9
    %v1234 = vmul.f32 %v82, 0.9
    %v1235 = vmul.f32 %v83, 0.9
    %v1236 = vmul.f32 %v84, 0.9
    %v1237 = vmul.f32 %v85, 0.9
    %v1238 = vmul.f32 %v86, 0.9
    %v1239 = vmul.f32 %v87, 0.9
    %v1240 = vmul.f32 %v88, 0.9
    %v1241 = vmul.f32 %v89, 0.9
    %v1242 = vmul.f32 %v90, 0.9
    %v1243 = vmul.f32 %v91, 0.9
    %v1244 = vmul.f32 %v92, 0.9
    %v1245 = vmul.f32 %v93, 0.9
    %v1246 = vmul.f32 %v94, 0.9
    %v1247 = vmul.f32 %v95, 0.9
    %v1248 = vmul.f32 %v96, 0.9
    %v1249 = vmul.f32 %v97, 0.9
    %v1250 = vmul.f32 %v98, 0.9
    %v1251 = vmul.f32 %v99, 0.9
    %v1252 = vmul.f32 %v100, 0.9
    %v1253 = vmul.f32 %v101, 0.9
    %v1254 = vmul.f32 %v102, 0.9
    %v1255 = vmul.f32 %v103, 0.9
    %v1256 = vmul.f32 %v104, 0.9
    %v1257 = vmul.f32 %v105, 0.9
    %v1258 = vmul.f32 %v106, 0.9
    %v1259 = vmul.f32 %v107, 0.9
    %v1260 = vmul.f32 %v108, 0.9
    %v1261 = vmul.f32 %v109, 0.9
    %v1262 = vmul.f32 %v110, 0.9
    %v1263 = vmul.f32 %v111, 0.9
    %v1264 = vmul.f32 %v112, 0.9
    %v1265 = vmul.f32 %v113, 0.9
    %v1266 = vmul.f32 %v114, 0.9
    %v1267 = vmul.f32 %v115, 0.9
    %v1268 = vmul.f32 %v116, 0.9
    %v1269 = vmul.f32 %v117, 0.9
    %v1270 = vmul.f32 %v118, 0.9
    %v1271 = vmul.f32 %v119, 0.9
    %v1272 = vmul.f32 %v120, 0.9
    %v1273 = vmul.f32 %v121, 0.9
    %v1274 = vmul.f32 %v122, 0.9
    %v1275 = vmul.f32 %v123, 0.9
    %v1276 = vmul.f32 %v124, 0.9
    %v1277 = vmul.f32 %v125, 0.9
    %v1278 = vmul.f32 %v126, 0.9
    %v1279 = vmul.f32 %v127, 0.9
    %v1280 = vmul.f32 %v128, 0.9
    %v1281 = vmul.f32 %v129, 0.9
    %v1282 = vmul.f32 %v130, 0.9
    %v1283 = vmul.f32 %v131, 0.9
    %v1284 = vmul.f32 %v132, 0.9
    %v1285 = vmul.f32 %v133, 0.9
    %v1286 = vmul.f32 %v134, 0.9
    %v1287 = vmul.f32 %v135, 0.9
    %v1288 = vmul.f32 %v136, 0.9
    %v1289 = vmul.f32 %v137, 0.9
    %v1290 = vmul.f32 %v138, 0.9
    %v1291 = vmul.f32 %v139, 0.9
    %v1292 = vmul.f32 %v140, 0.9
    %v1293 = vmul.f32 %v141, 0.9
    %v1294 = vmul.f32 %v142, 0.9
    %v1295 = vmul.f32 %v143, 0.9
    %v1296 = vmul.f32 %v144, 0.9
    %v1297 = vmul.f32 %v145, 0.9
    %v1298 = vmul.f32 %v146, 0.9
    %v1299 = vmul.f32 %v147, 0.9
    %v1300 = vmul.f32 %v148, 0.9
    %v1301 = vmul.f32 %v149, 0.9
    %v1302 = vmul.f32 %v150, 0.9
    %v1303 = vmul.f32 %v151, 0.9
    %v1304 = vmul.f32 %v152, 0.9
    %v1305 = vmul.f32 %v153, 0.9
    %v1306 = vmul.f32 %v154, 0.9
    %v1307 = vmul.f32 %v155, 0.9
    %v1308 = vmul.f32 %v156, 0.9
    %v1309 = vmul.f32 %v157, 0.9
    %v1310 = vmul.f32 %v158, 0.9
    %v1311 = vmul.f32 %v159, 0.9
    %v1312 = vmul.f32 %v160, 0.9
    %v1313 = vmul.f32 %v161, 0.9
    %v1314 = vmul.f32 %v162, 0.9
    %v1315 = vmul.f32 %v163, 0.9
    %v1316 = vmul.f32 %v164, 0.9
    %v1317 = vmul.f32 %v165, 0.9
    %v1318 = vmul.f32 %v166, 0.9
    %v1319 = vmul.f32 %v167, 0.9
    %v1320 = vmul.f32 %v168, 0.9
    %v1321 = vmul.f32 %v169, 0.9
    %v1322 = vmul.f32 %v170, 0.9
    %v1323 = vmul.f32 %v171, 0.9
    %v1324 = vmul.f32 %v172, 0.9
    %v1325 = vmul.f32 %v173, 0.9
    %v1326 = vmul.f32 %v174, 0.9
    %v1327 = vmul.f32 %v175, 0.9
    %v1328 = vmul.f32 %v176, 0.9
    %v1329 = vmul.f32 %v177, 0.9
    %v1330 = vmul.f32 %v178, 0.9
    %v1331 = vmul.f32 %v179, 0.9
    %v1332 = vmul.f32 %v180, 0.9
    %v1333 = vmul.f32 %v181, 0.9
    %v1334 = vmul.f32 %v182, 0.9
    %v1335 = vmul.f32 %v183, 0.9
    %v1336 = vmul.f32 %v184, 0.9
    %v1337 = vmul.f32 %v185, 0.9
    %v1338 = vsub.f32 %v1082, %v1210
    %v1339 = vsub.f32 %v1083, %v1211
    %v1340 = vsub.f32 %v1084, %v1212
    %v1341 = vsub.f32 %v1085, %v1213
    %v1342 = vsub.f32 %v1086, %v1214
    %v1343 = vsub.f32 %v1087, %v1215
    %v1344 = vsub.f32 %v1088, %v1216
    %v1345 = vsub.f32 %v1089, %v1217
    %v1346 = vsub.f32 %v1090, %v1218
    %v1347 = vsub.f32 %v1091, %v1219
    %v1348 = vsub.f32 %v1092, %v1220
    %v1349 = vsub.f32 %v1093, %v1221
    %v1350 = vsub.f32 %v1094, %v1222
    %v1351 = vsub.f32 %v1095, %v1223
    %v1352 = vsub.f32 %v1096, %v1224
    %v1353 = vsub.f32 %v1097, %v1225
    %v1354 = vsub.f32 %v1098, %v1226
    %v1355 = vsub.f32 %v1099, %v1227
    %v1356 = vsub.f32 %v1100, %v1228
    %v1357 = vsub.f32 %v1101, %v1229
    %v1358 = vsub.f32 %v1102, %v1230
    %v1359 = vsub.f32 %v1103, %v1231
    %v1360 = vsub.f32 %v1104, %v1232
    %v1361 = vsub.f32 %v1105, %v1233
    %v1362 = vsub.f32 %v1106, %v1234
    %v1363 = vsub.f32 %v1107, %v1235
    %v1364 = vsub.f32 %v1108, %v1236
    %v1365 = vsub.f32 %v1109, %v1237
    %v1366 = vsub.f32 %v1110, %v1238
    %v1367 = vsub.f32 %v1111, %v1239
    %v1368 = vsub.f32 %v1112, %v1240
    %v1369 = vsub.f32 %v1113, %v1241
    %v1370 = vsub.f32 %v1114, %v1242
    %v1371 = vsub.f32 %v1115, %v1243
    %v1372 = vsub.f32 %v1116, %v1244
    %v1373 = vsub.f32 %v1117, %v1245
    %v1374 = vsub.f32 %v1118, %v1246
    %v1375 = vsub.f32 %v1119, %v1247
    %v1376 = vsub.f32 %v1120, %v1248
    %v1377 = vsub.f32 %v1121, %v1249
    %v1378 = vsub.f32 %v1122, %v1250
    %v1379 = vsub.f32 %v1123, %v1251
    %v1380 = vsub.f32 %v1124, %v1252
    %v1381 = vsub.f32 %v1125, %v1253
    %v1382 = vsub.f32 %v1126, %v1254
    %v1383 = vsub.f32 %v1127, %v1255
    %v1384 = vsub.f32 %v1128, %v1256
    %v1385 = vsub.f32 %v1129, %v1257
    %v1386 = vsub.f32 %v1130, %v1258
    %v1387 = vsub.f32 %v1131, %v1259
    %v1388 = vsub.f32 %v1132, %v1260
    %v1389 = vsub.f32 %v1133, %v1261
    %v1390 = vsub.f32 %v1134, %v1262
    %v1391 = vsub.f32 %v1135, %v1263
    %v1392 = vsub.f32 %v1136, %v1264
    %v1393 = vsub.f32 %v1137, %v1265
    %v1394 = vsub.f32 %v1138, %v1266
    %v1395 = vsub.f32 %v1139, %v1267
    %v1396 = vsub.f32 %v1140, %v1268
    %v1397 = vsub.f32 %v1141, %v1269
    %v1398 = vsub.f32 %v1142, %v1270
    %v1399 = vsub.f32 %v1143, %v1271
    %v1400 = vsub.f32 %v1144, %v1272
    %v1401 = vsub.f32 %v1145, %v1273
    %v1402 = vsub.f32 %v1146, %v1274
    %v1403 = vsub.f32 %v1147, %v1275
    %v1404 = vsub.f32 %v1148, %v1276
    %v1405 = vsub.f32 %v1149, %v1277
    %v1406 = vsub.f32 %v1150, %v1278
    %v1407 = vsub.f32 %v1151, %v1279
    %v1408 = vsub.f32 %v1152, %v1280
    %v1409 = vsub.f32 %v1153, %v1281
    %v1410 = vsub.f32 %v1154, %v1282
    %v1411 = vsub.f32 %v1155, %v1283
    %v1412 = vsub.f32 %v1156, %v1284
    %v1413 = vsub.f32 %v1157, %v1285
    %v1414 = vsub.f32 %v1158, %v1286
    %v1415 = vsub.f32 %v1159, %v1287
    %v1416 = vsub.f32 %v1160, %v1288
    %v1417 = vsub.f32 %v1161, %v1289
    %v1418 = vsub.f32 %v1162, %v1290
    %v1419 = vsub.f32 %v1163, %v1291
    %v1420 = vsub.f32 %v1164, %v1292
    %v1421 = vsub.f32 %v1165, %v1293
    %v1422 = vsub.f32 %v1166, %v1294
    %v1423 = vsub.f32 %v1167, %v1295
    %v1424 = vsub.f32 %v1168, %v1296
    %v1425 = vsub.f32 %v1169, %v1297
    %v1426 = vsub.f32 %v1170, %v1298
    %v1427 = vsub.f32 %v1171, %v1299
    %v1428 = vsub.f32 %v1172, %v1300
    %v1429 = vsub.f32 %v1173, %v1301
    %v1430 = vsub.f32 %v1174, %v1302
    %v1431 = vsub.f32 %v1175, %v1303
    %v1432 = vsub.f32 %v1176, %v1304
    %v1433 = vsub.f32 %v1177, %v1305
    %v1434 = vsub.f32 %v1178, %v1306
    %v1435 = vsub.f32 %v1179, %v1307
    %v1436 = vsub.f32 %v1180, %v1308
    %v1437 = vsub.f32 %v1181, %v1309
    %v1438 = vsub.f32 %v1182, %v1310
    %v1439 = vsub.f32 %v1183, %v1311
    %v1440 = vsub.f32 %v1184, %v1312
    %v1441 = vsub.f32 %v1185, %v1313
    %v1442 = vsub.f32 %v1186, %v1314
    %v1443 = vsub.f32 %v1187, %v1315
    %v1444 = vsub.f32 %v1188, %v1316
    %v1445 = vsub.f32 %v1189, %v1317
    %v1446 = vsub.f32 %v1190, %v1318
    %v1447 = vsub.f32 %v1191, %v1319
    %v1448 = vsub.f32 %v1192, %v1320
    %v1449 = vsub.f32 %v1193, %v1321
    %v1450 = vsub.f32 %v1194, %v1322
    %v1451 = vsub.f32 %v1195, %v1323
    %v1452 = vsub.f32 %v1196, %v1324
    %v1453 = vsub.f32 %v1197, %v1325
    %v1454 = vsub.f32 %v1198, %v1326
    %v1455 = vsub.f32 %v1199, %v1327
    %v1456 = vsub.f32 %v1200, %v1328
    %v1457 = vsub.f32 %v1201, %v1329
    %v1458 = vsub.f32 %v1202, %v1330
    %v1459 = vsub.f32 %v1203, %v1331
    %v1460 = vsub.f32 %v1204, %v1332
    %v1461 = vsub.f32 %v1205, %v1333
    %v1462 = vsub.f32 %v1206, %v1334
    %v1463 = vsub.f32 %v1207, %v1335
    %v1464 = vsub.f32 %v1208, %v1336
    %v1465 = vsub.f32 %v1209, %v1337
    %v1466 = vadd.f32 %v1338, %v827
    %v1467 = vadd.f32 %v1339, %v829
    %v1468 = vadd.f32 %v1340, %v831
    %v1469 = vadd.f32 %v1341, %v833
    %v1470 = vadd.f32 %v1342, %v835
    %v1471 = vadd.f32 %v1343, %v837
    %v1472 = vadd.f32 %v1344, %v839
    %v1473 = vadd.f32 %v1345, %v841
    %v1474 = vadd.f32 %v1346, %v843
    %v1475 = vadd.f32 %v1347, %v845
    %v1476 = vadd.f32 %v1348, %v847
    %v1477 = vadd.f32 %v1349, %v849
    %v1478 = vadd.f32 %v1350, %v851
    %v1479 = vadd.f32 %v1351, %v853
    %v1480 = vadd.f32 %v1352, %v855
    %v1481 = vadd.f32 %v1353, %v857
    %v1482 = vadd.f32 %v1354, %v859
    %v1483 = vadd.f32 %v1355, %v861
    %v1484 = vadd.f32 %v1356, %v863
    %v1485 = vadd.f32 %v1357, %v865
    %v1486 = vadd.f32 %v1358, %v867
    %v1487 = vadd.f32 %v1359, %v869
    %v1488 = vadd.f32 %v1360, %v871
    %v1489 = vadd.f32 %v1361, %v873
    %v1490 = vadd.f32 %v1362, %v875
    %v1491 = vadd.f32 %v1363, %v877
    %v1492 = vadd.f32 %v1364, %v879
    %v1493 = vadd.f32 %v1365, %v881
    %v1494 = vadd.f32 %v1366, %v883
    %v1495 = vadd.f32 %v1367, %v885
    %v1496 = vadd.f32 %v1368, %v887
    %v1497 = vadd.f32 %v1369, %v889
    %v1498 = vadd.f32 %v1370, %v891
    %v1499 = vadd.f32 %v1371, %v893
    %v1500 = vadd.f32 %v1372, %v895
    %v1501 = vadd.f32 %v1373, %v897
    %v1502 = vadd.f32 %v1374, %v899
    %v1503 = vadd.f32 %v1375, %v901
    %v1504 = vadd.f32 %v1376, %v903
    %v1505 = vadd.f32 %v1377, %v905
    %v1506 = vadd.f32 %v1378, %v907
    %v1507 = vadd.f32 %v1379, %v909
    %v1508 = vadd.f32 %v1380, %v911
    %v1509 = vadd.f32 %v1381, %v913
    %v1510 = vadd.f32 %v1382, %v915
    %v1511 = vadd.f32 %v1383, %v917
    %v1512 = vadd.f32 %v1384, %v919
    %v1513 = vadd.f32 %v1385, %v921
    %v1514 = vadd.f32 %v1386, %v923
    %v1515 = vadd.f32 %v1387, %v925
    %v1516 = vadd.f32 %v1388, %v927
    %v1517 = vadd.f32 %v1389, %v929
    %v1518 = vadd.f32 %v1390, %v931
    %v1519 = vadd.f32 %v1391, %v933
    %v1520 = vadd.f32 %v1392, %v935
    %v1521 = vadd.f32 %v1393, %v937
    %v1522 = vadd.f32 %v1394, %v939
    %v1523 = vadd.f32 %v1395, %v941
    %v1524 = vadd.f32 %v1396, %v943
    %v1525 = vadd.f32 %v1397, %v945
    %v1526 = vadd.f32 %v1398, %v947
    %v1527 = vadd.f32 %v1399, %v949
    %v1528 = vadd.f32 %v1400, %v951
    %v1529 = vadd.f32 %v1401, %v953
    %v1530 = vadd.f32 %v1402, %v955
    %v1531 = vadd.f32 %v1403, %v957
    %v1532 = vadd.f32 %v1404, %v959
    %v1533 = vadd.f32 %v1405, %v961
    %v1534 = vadd.f32 %v1406, %v963
    %v1535 = vadd.f32 %v1407, %v965
    %v1536 = vadd.f32 %v1408, %v967
    %v1537 = vadd.f32 %v1409, %v969
    %v1538 = vadd.f32 %v1410, %v971
    %v1539 = vadd.f32 %v1411, %v973
    %v1540 = vadd.f32 %v1412, %v975
    %v1541 = vadd.f32 %v1413, %v977
    %v1542 = vadd.f32 %v1414, %v979
    %v1543 = vadd.f32 %v1415, %v981
    %v1544 = vadd.f32 %v1416, %v983
    %v1545 = vadd.f32 %v1417, %v985
    %v1546 = vadd.f32 %v1418, %v987
    %v1547 = vadd.f32 %v1419, %v989
    %v1548 = vadd.f32 %v1420, %v991
    %v1549 = vadd.f32 %v1421, %v993
    %v1550 = vadd.f32 %v1422, %v995
    %v1551 = vadd.f32 %v1423, %v997
    %v1552 = vadd.f32 %v1424, %v999
    %v1553 = vadd.f32 %v1425, %v1001
    %v1554 = vadd.f32 %v1426, %v1003
    %v1555 = vadd.f32 %v1427, %v1005
    %v1556 = vadd.f32 %v1428, %v1007
    %v1557 = vadd.f32 %v1429, %v1009
    %v1558 = vadd.f32 %v1430, %v1011
    %v1559 = vadd.f32 %v1431, %v1013
    %v1560 = vadd.f32 %v1432, %v1015
    %v1561 = vadd.f32 %v1433, %v1017
    %v1562 = vadd.f32 %v1434, %v1019
    %v1563 = vadd.f32 %v1435, %v1021
    %v1564 = vadd.f32 %v1436, %v1023
    %v1565 = vadd.f32 %v1437, %v1025
    %v1566 = vadd.f32 %v1438, %v1027
    %v1567 = vadd.f32 %v1439, %v1029
    %v1568 = vadd.f32 %v1440, %v1031
    %v1569 = vadd.f32 %v1441, %v1033
    %v1570 = vadd.f32 %v1442, %v1035
    %v1571 = vadd.f32 %v1443, %v1037
    %v1572 = vadd.f32 %v1444, %v1039
    %v1573 = vadd.f32 %v1445, %v1041
    %v1574 = vadd.f32 %v1446, %v1043
    %v1575 = vadd.f32 %v1447, %v1045
    %v1576 = vadd.f32 %v1448, %v1047
    %v1577 = vadd.f32 %v1449, %v1049
    %v1578 = vadd.f32 %v1450, %v1051
    %v1579 = vadd.f32 %v1451, %v1053
    %v1580 = vadd.f32 %v1452, %v1055
    %v1581 = vadd.f32 %v1453, %v1057
    %v1582 = vadd.f32 %v1454, %v1059
    %v1583 = vadd.f32 %v1455, %v1061
    %v1584 = vadd.f32 %v1456, %v1063
    %v1585 = vadd.f32 %v1457, %v1065
    %v1586 = vadd.f32 %v1458, %v1067
    %v1587 = vadd.f32 %v1459, %v1069
    %v1588 = vadd.f32 %v1460, %v1071
    %v1589 = vadd.f32 %v1461, %v1073
    %v1590 = vadd.f32 %v1462, %v1075
    %v1591 = vadd.f32 %v1463, %v1077
    %v1592 = vadd.f32 %v1464, %v1079
    %v1593 = vadd.f32 %v1465, %v1081
    %v1594 = vld [vmem:[#allocation5] sm:$0xff]
    %v1595 = vld [vmem:[#allocation5 + $0x8] sm:$0xff]
    %v1596 = vld [vmem:[#allocation5 + $0x10] sm:$0xff]
    %v1597 = vld [vmem:[#allocation5 + $0x18] sm:$0xff]
    %v1598 = vld [vmem:[#allocation5 + $0x20] sm:$0xff]
    %v1599 = vld [vmem:[#allocation5 + $0x28] sm:$0xff]
    %v1600 = vld [vmem:[#allocation5 + $0x30] sm:$0xff]
    %v1601 = vld [vmem:[#allocation5 + $0x38] sm:$0xff]
    %v1602 = vld [vmem:[#allocation5 + $0x40] sm:$0xff]
    %v1603 = vld [vmem:[#allocation5 + $0x48] sm:$0xff]
    %v1604 = vld [vmem:[#allocation5 + $0x50] sm:$0xff]
    %v1605 = vld [vmem:[#allocation5 + $0x58] sm:$0xff]
    %v1606 = vld [vmem:[#allocation5 + $0x60] sm:$0xff]
    %v1607 = vld [vmem:[#allocation5 + $0x68] sm:$0xff]
    %v1608 = vld [vmem:[#allocation5 + $0x70] sm:$0xff]
    %v1609 = vld [vmem:[#allocation5 + $0x78] sm:$0xff]
    %v1610 = vld [vmem:[#allocation5 + $0x80] sm:$0xff]
    %v1611 = vld [vmem:[#allocation5 + $0x88] sm:$0xff]
    %v1612 = vld [vmem:[#allocation5 + $0x90] sm:$0xff]
    %v1613 = vld [vmem:[#allocation5 + $0x98] sm:$0xff]
    %v1614 = vld [vmem:[#allocation5 + $0xa0] sm:$0xff]
    %v1615 = vld [vmem:[#allocation5 + $0xa8] sm:$0xff]
    %v1616 = vld [vmem:[#allocation5 + $0xb0] sm:$0xff]
    %v1617 = vld [vmem:[#allocation5 + $0xb8] sm:$0xff]
    %v1618 = vld [vmem:[#allocation5 + $0xc0] sm:$0xff]
    %v1619 = vld [vmem:[#allocation5 + $0xc8] sm:$0xff]
    %v1620 = vld [vmem:[#allocation5 + $0xd0] sm:$0xff]
    %v1621 = vld [vmem:[#allocation5 + $0xd8] sm:$0xff]
    %v1622 = vld [vmem:[#allocation5 + $0xe0] sm:$0xff]
    %v1623 = vld [vmem:[#allocation5 + $0xe8] sm:$0xff]
    %v1624 = vld [vmem:[#allocation5 + $0xf0] sm:$0xff]
    %v1625 = vld [vmem:[#allocation5 + $0xf8] sm:$0xff]
    %v1626 = vld [vmem:[#allocation5 + $0x100] sm:$0xff]
    %v1627 = vld [vmem:[#allocation5 + $0x108] sm:$0xff]
    %v1628 = vld [vmem:[#allocation5 + $0x110] sm:$0xff]
    %v1629 = vld [vmem:[#allocation5 + $0x118] sm:$0xff]
    %v1630 = vld [vmem:[#allocation5 + $0x120] sm:$0xff]
    %v1631 = vld [vmem:[#allocation5 + $0x128] sm:$0xff]
    %v1632 = vld [vmem:[#allocation5 + $0x130] sm:$0xff]
    %v1633 = vld [vmem:[#allocation5 + $0x138] sm:$0xff]
    %v1634 = vld [vmem:[#allocation5 + $0x140] sm:$0xff]
    %v1635 = vld [vmem:[#allocation5 + $0x148] sm:$0xff]
    %v1636 = vld [vmem:[#allocation5 + $0x150] sm:$0xff]
    %v1637 = vld [vmem:[#allocation5 + $0x158] sm:$0xff]
    %v1638 = vld [vmem:[#allocation5 + $0x160] sm:$0xff]
    %v1639 = vld [vmem:[#allocation5 + $0x168] sm:$0xff]
    %v1640 = vld [vmem:[#allocation5 + $0x170] sm:$0xff]
    %v1641 = vld [vmem:[#allocation5 + $0x178] sm:$0xff]
    %v1642 = vld [vmem:[#allocation5 + $0x180] sm:$0xff]
    %v1643 = vld [vmem:[#allocation5 + $0x188] sm:$0xff]
    %v1644 = vld [vmem:[#allocation5 + $0x190] sm:$0xff]
    %v1645 = vld [vmem:[#allocation5 + $0x198] sm:$0xff]
    %v1646 = vld [vmem:[#allocation5 + $0x1a0] sm:$0xff]
    %v1647 = vld [vmem:[#allocation5 + $0x1a8] sm:$0xff]
    %v1648 = vld [vmem:[#allocation5 + $0x1b0] sm:$0xff]
    %v1649 = vld [vmem:[#allocation5 + $0x1b8] sm:$0xff]
    %v1650 = vld [vmem:[#allocation5 + $0x1c0] sm:$0xff]
    %v1651 = vld [vmem:[#allocation5 + $0x1c8] sm:$0xff]
    %v1652 = vld [vmem:[#allocation5 + $0x1d0] sm:$0xff]
    %v1653 = vld [vmem:[#allocation5 + $0x1d8] sm:$0xff]
    %v1654 = vld [vmem:[#allocation5 + $0x1e0] sm:$0xff]
    %v1655 = vld [vmem:[#allocation5 + $0x1e8] sm:$0xff]
    %v1656 = vld [vmem:[#allocation5 + $0x1f0] sm:$0xff]
    %v1657 = vld [vmem:[#allocation5 + $0x1f8] sm:$0xff]
    %v1658 = vld [vmem:[#allocation5 + $0x200] sm:$0xff]
    %v1659 = vld [vmem:[#allocation5 + $0x208] sm:$0xff]
    %v1660 = vld [vmem:[#allocation5 + $0x210] sm:$0xff]
    %v1661 = vld [vmem:[#allocation5 + $0x218] sm:$0xff]
    %v1662 = vld [vmem:[#allocation5 + $0x220] sm:$0xff]
    %v1663 = vld [vmem:[#allocation5 + $0x228] sm:$0xff]
    %v1664 = vld [vmem:[#allocation5 + $0x230] sm:$0xff]
    %v1665 = vld [vmem:[#allocation5 + $0x238] sm:$0xff]
    %v1666 = vld [vmem:[#allocation5 + $0x240] sm:$0xff]
    %v1667 = vld [vmem:[#allocation5 + $0x248] sm:$0xff]
    %v1668 = vld [vmem:[#allocation5 + $0x250] sm:$0xff]
    %v1669 = vld [vmem:[#allocation5 + $0x258] sm:$0xff]
    %v1670 = vld [vmem:[#allocation5 + $0x260] sm:$0xff]
    %v1671 = vld [vmem:[#allocation5 + $0x268] sm:$0xff]
    %v1672 = vld [vmem:[#allocation5 + $0x270] sm:$0xff]
    %v1673 = vld [vmem:[#allocation5 + $0x278] sm:$0xff]
    %v1674 = vld [vmem:[#allocation5 + $0x280] sm:$0xff]
    %v1675 = vld [vmem:[#allocation5 + $0x288] sm:$0xff]
    %v1676 = vld [vmem:[#allocation5 + $0x290] sm:$0xff]
    %v1677 = vld [vmem:[#allocation5 + $0x298] sm:$0xff]
    %v1678 = vld [vmem:[#allocation5 + $0x2a0] sm:$0xff]
    %v1679 = vld [vmem:[#allocation5 + $0x2a8] sm:$0xff]
    %v1680 = vld [vmem:[#allocation5 + $0x2b0] sm:$0xff]
    %v1681 = vld [vmem:[#allocation5 + $0x2b8] sm:$0xff]
    %v1682 = vld [vmem:[#allocation5 + $0x2c0] sm:$0xff]
    %v1683 = vld [vmem:[#allocation5 + $0x2c8] sm:$0xff]
    %v1684 = vld [vmem:[#allocation5 + $0x2d0] sm:$0xff]
    %v1685 = vld [vmem:[#allocation5 + $0x2d8] sm:$0xff]
    %v1686 = vld [vmem:[#allocation5 + $0x2e0] sm:$0xff]
    %v1687 = vld [vmem:[#allocation5 + $0x2e8] sm:$0xff]
    %v1688 = vld [vmem:[#allocation5 + $0x2f0] sm:$0xff]
    %v1689 = vld [vmem:[#allocation5 + $0x2f8] sm:$0xff]
    %v1690 = vld [vmem:[#allocation5 + $0x300] sm:$0xff]
    %v1691 = vld [vmem:[#allocation5 + $0x308] sm:$0xff]
    %v1692 = vld [vmem:[#allocation5 + $0x310] sm:$0xff]
    %v1693 = vld [vmem:[#allocation5 + $0x318] sm:$0xff]
    %v1694 = vld [vmem:[#allocation5 + $0x320] sm:$0xff]
    %v1695 = vld [vmem:[#allocation5 + $0x328] sm:$0xff]
    %v1696 = vld [vmem:[#allocation5 + $0x330] sm:$0xff]
    %v1697 = vld [vmem:[#allocation5 + $0x338] sm:$0xff]
    %v1698 = vld [vmem:[#allocation5 + $0x340] sm:$0xff]
    %v1699 = vld [vmem:[#allocation5 + $0x348] sm:$0xff]
    %v1700 = vld [vmem:[#allocation5 + $0x350] sm:$0xff]
    %v1701 = vld [vmem:[#allocation5 + $0x358] sm:$0xff]
    %v1702 = vld [vmem:[#allocation5 + $0x360] sm:$0xff]
    %v1703 = vld [vmem:[#allocation5 + $0x368] sm:$0xff]
    %v1704 = vld [vmem:[#allocation5 + $0x370] sm:$0xff]
    %v1705 = vld [vmem:[#allocation5 + $0x378] sm:$0xff]
    %v1706 = vld [vmem:[#allocation5 + $0x380] sm:$0xff]
    %v1707 = vld [vmem:[#allocation5 + $0x388] sm:$0xff]
    %v1708 = vld [vmem:[#allocation5 + $0x390] sm:$0xff]
    %v1709 = vld [vmem:[#allocation5 + $0x398] sm:$0xff]
    %v1710 = vld [vmem:[#allocation5 + $0x3a0] sm:$0xff]
    %v1711 = vld [vmem:[#allocation5 + $0x3a8] sm:$0xff]
    %v1712 = vld [vmem:[#allocation5 + $0x3b0] sm:$0xff]
    %v1713 = vld [vmem:[#allocation5 + $0x3b8] sm:$0xff]
    %v1714 = vld [vmem:[#allocation5 + $0x3c0] sm:$0xff]
    %v1715 = vld [vmem:[#allocation5 + $0x3c8] sm:$0xff]
    %v1716 = vld [vmem:[#allocation5 + $0x3d0] sm:$0xff]
    %v1717 = vld [vmem:[#allocation5 + $0x3d8] sm:$0xff]
    %v1718 = vld [vmem:[#allocation5 + $0x3e0] sm:$0xff]
    %v1719 = vld [vmem:[#allocation5 + $0x3e8] sm:$0xff]
    %v1720 = vld [vmem:[#allocation5 + $0x3f0] sm:$0xff]
    %v1721 = vld [vmem:[#allocation5 + $0x3f8] sm:$0xff]
    %v1722 = vand.u32 2147483647, %v1594
    %v1723 = vand.u32 2147483647, %v1595
    %v1724 = vand.u32 2147483647, %v1596
    %v1725 = vand.u32 2147483647, %v1597
    %v1726 = vand.u32 2147483647, %v1598
    %v1727 = vand.u32 2147483647, %v1599
    %v1728 = vand.u32 2147483647, %v1600
    %v1729 = vand.u32 2147483647, %v1601
    %v1730 = vand.u32 2147483647, %v1602
    %v1731 = vand.u32 2147483647, %v1603
    %v1732 = vand.u32 2147483647, %v1604
    %v1733 = vand.u32 2147483647, %v1605
    %v1734 = vand.u32 2147483647, %v1606
    %v1735 = vand.u32 2147483647, %v1607
    %v1736 = vand.u32 2147483647, %v1608
    %v1737 = vand.u32 2147483647, %v1609
    %v1738 = vand.u32 2147483647, %v1610
    %v1739 = vand.u32 2147483647, %v1611
    %v1740 = vand.u32 2147483647, %v1612
    %v1741 = vand.u32 2147483647, %v1613
    %v1742 = vand.u32 2147483647, %v1614
    %v1743 = vand.u32 2147483647, %v1615
    %v1744 = vand.u32 2147483647, %v1616
    %v1745 = vand.u32 2147483647, %v1617
    %v1746 = vand.u32 2147483647, %v1618
    %v1747 = vand.u32 2147483647, %v1619
    %v1748 = vand.u32 2147483647, %v1620
    %v1749 = vand.u32 2147483647, %v1621
    %v1750 = vand.u32 2147483647, %v1622
    %v1751 = vand.u32 2147483647, %v1623
    %v1752 = vand.u32 2147483647, %v1624
    %v1753 = vand.u32 2147483647, %v1625
    %v1754 = vand.u32 2147483647, %v1626
    %v1755 = vand.u32 2147483647, %v1627
    %v1756 = vand.u32 2147483647, %v1628
    %v1757 = vand.u32 2147483647, %v1629
    %v1758 = vand.u32 2147483647, %v1630
    %v1759 = vand.u32 2147483647, %v1631
    %v1760 = vand.u32 2147483647, %v1632
    %v1761 = vand.u32 2147483647, %v1633
    %v1762 = vand.u32 2147483647, %v1634
    %v1763 = vand.u32 2147483647, %v1635
    %v1764 = vand.u32 2147483647, %v1636
    %v1765 = vand.u32 2147483647, %v1637
    %v1766 = vand.u32 2147483647, %v1638
    %v1767 = vand.u32 2147483647, %v1639
    %v1768 = vand.u32 2147483647, %v1640
    %v1769 = vand.u32 2147483647, %v1641
    %v1770 = vand.u32 2147483647, %v1642
    %v1771 = vand.u32 2147483647, %v1643
    %v1772 = vand.u32 2147483647, %v1644
    %v1773 = vand.u32 2147483647, %v1645
    %v1774 = vand.u32 2147483647, %v1646
    %v1775 = vand.u32 2147483647, %v1647
    %v1776 = vand.u32 2147483647, %v1648
    %v1777 = vand.u32 2147483647, %v1649
    %v1778 = vand.u32 2147483647, %v1650
    %v1779 = vand.u32 2147483647, %v1651
    %v1780 = vand.u32 2147483647, %v1652
    %v1781 = vand.u32 2147483647, %v1653
    %v1782 = vand.u32 2147483647, %v1654
    %v1783 = vand.u32 2147483647, %v1655
    %v1784 = vand.u32 2147483647, %v1656
    %v1785 = vand.u32 2147483647, %v1657
    %v1786 = vand.u32 2147483647, %v1658
    %v1787 = vand.u32 2147483647, %v1659
    %v1788 = vand.u32 2147483647, %v1660
    %v1789 = vand.u32 2147483647, %v1661
    %v1790 = vand.u32 2147483647, %v1662
    %v1791 = vand.u32 2147483647, %v1663
    %v1792 = vand.u32 2147483647, %v1664
    %v1793 = vand.u32 2147483647, %v1665
    %v1794 = vand.u32 2147483647, %v1666
    %v1795 = vand.u32 2147483647, %v1667
    %v1796 = vand.u32 2147483647, %v1668
    %v1797 = vand.u32 2147483647, %v1669
    %v1798 = vand.u32 2147483647, %v1670
    %v1799 = vand.u32 2147483647, %v1671
    %v1800 = vand.u32 2147483647, %v1672
    %v1801 = vand.u32 2147483647, %v1673
    %v1802 = vand.u32 2147483647, %v1674
    %v1803 = vand.u32 2147483647, %v1675
    %v1804 = vand.u32 2147483647, %v1676
    %v1805 = vand.u32 2147483647, %v1677
    %v1806 = vand.u32 2147483647, %v1678
    %v1807 = vand.u32 2147483647, %v1679
    %v1808 = vand.u32 2147483647, %v1680
    %v1809 = vand.u32 2147483647, %v1681
    %v1810 = vand.u32 2147483647, %v1682
    %v1811 = vand.u32 2147483647, %v1683
    %v1812 = vand.u32 2147483647, %v1684
    %v1813 = vand.u32 2147483647, %v1685
    %v1814 = vand.u32 2147483647, %v1686
    %v1815 = vand.u32 2147483647, %v1687
    %v1816 = vand.u32 2147483647, %v1688
    %v1817 = vand.u32 2147483647, %v1689
    %v1818 = vand.u32 2147483647, %v1690
    %v1819 = vand.u32 2147483647, %v1691
    %v1820 = vand.u32 2147483647, %v1692
    %v1821 = vand.u32 2147483647, %v1693
    %v1822 = vand.u32 2147483647, %v1694
    %v1823 = vand.u32 2147483647, %v1695
    %v1824 = vand.u32 2147483647, %v1696
    %v1825 = vand.u32 2147483647, %v1697
    %v1826 = vand.u32 2147483647, %v1698
    %v1827 = vand.u32 2147483647, %v1699
    %v1828 = vand.u32 2147483647, %v1700
    %v1829 = vand.u32 2147483647, %v1701
    %v1830 = vand.u32 2147483647, %v1702
    %v1831 = vand.u32 2147483647, %v1703
    %v1832 = vand.u32 2147483647, %v1704
    %v1833 = vand.u32 2147483647, %v1705
    %v1834 = vand.u32 2147483647, %v1706
    %v1835 = vand.u32 2147483647, %v1707
    %v1836 = vand.u32 2147483647, %v1708
    %v1837 = vand.u32 2147483647, %v1709
    %v1838 = vand.u32 2147483647, %v1710
    %v1839 = vand.u32 2147483647, %v1711
    %v1840 = vand.u32 2147483647, %v1712
    %v1841 = vand.u32 2147483647, %v1713
    %v1842 = vand.u32 2147483647, %v1714
    %v1843 = vand.u32 2147483647, %v1715
    %v1844 = vand.u32 2147483647, %v1716
    %v1845 = vand.u32 2147483647, %v1717
    %v1846 = vand.u32 2147483647, %v1718
    %v1847 = vand.u32 2147483647, %v1719
    %v1848 = vand.u32 2147483647, %v1720
    %v1849 = vand.u32 2147483647, %v1721
    %v1850 = vsub.f32 0.0, %v1722
    %v1851 = vsub.f32 0.0, %v1723
    %v1852 = vsub.f32 0.0, %v1724
    %v1853 = vsub.f32 0.0, %v1725
    %v1854 = vsub.f32 0.0, %v1726
    %v1855 = vsub.f32 0.0, %v1727
    %v1856 = vsub.f32 0.0, %v1728
    %v1857 = vsub.f32 0.0, %v1729
    %v1858 = vsub.f32 0.0, %v1730
    %v1859 = vsub.f32 0.0, %v1731
    %v1860 = vsub.f32 0.0, %v1732
    %v1861 = vsub.f32 0.0, %v1733
    %v1862 = vsub.f32 0.0, %v1734
    %v1863 = vsub.f32 0.0, %v1735
    %v1864 = vsub.f32 0.0, %v1736
    %v1865 = vsub.f32 0.0, %v1737
    %v1866 = vsub.f32 0.0, %v1738
    %v1867 = vsub.f32 0.0, %v1739
    %v1868 = vsub.f32 0.0, %v1740
    %v1869 = vsub.f32 0.0, %v1741
    %v1870 = vsub.f32 0.0, %v1742
    %v1871 = vsub.f32 0.0, %v1743
    %v1872 = vsub.f32 0.0, %v1744
    %v1873 = vsub.f32 0.0, %v1745
    %v1874 = vsub.f32 0.0, %v1746
    %v1875 = vsub.f32 0.0, %v1747
    %v1876 = vsub.f32 0.0, %v1748
    %v1877 = vsub.f32 0.0, %v1749
    %v1878 = vsub.f32 0.0, %v1750
    %v1879 = vsub.f32 0.0, %v1751
    %v1880 = vsub.f32 0.0, %v1752
    %v1881 = vsub.f32 0.0, %v1753
    %v1882 = vsub.f32 0.0, %v1754
    %v1883 = vsub.f32 0.0, %v1755
    %v1884 = vsub.f32 0.0, %v1756
    %v1885 = vsub.f32 0.0, %v1757
    %v1886 = vsub.f32 0.0, %v1758
    %v1887 = vsub.f32 0.0, %v1759
    %v1888 = vsub.f32 0.0, %v1760
    %v1889 = vsub.f32 0.0, %v1761
    %v1890 = vsub.f32 0.0, %v1762
    %v1891 = vsub.f32 0.0, %v1763
    %v1892 = vsub.f32 0.0, %v1764
    %v1893 = vsub.f32 0.0, %v1765
    %v1894 = vsub.f32 0.0, %v1766
    %v1895 = vsub.f32 0.0, %v1767
    %v1896 = vsub.f32 0.0, %v1768
    %v1897 = vsub.f32 0.0, %v1769
    %v1898 = vsub.f32 0.0, %v1770
    %v1899 = vsub.f32 0.0, %v1771
    %v1900 = vsub.f32 0.0, %v1772
    %v1901 = vsub.f32 0.0, %v1773
    %v1902 = vsub.f32 0.0, %v1774
    %v1903 = vsub.f32 0.0, %v1775
    %v1904 = vsub.f32 0.0, %v1776
    %v1905 = vsub.f32 0.0, %v1777
    %v1906 = vsub.f32 0.0, %v1778
    %v1907 = vsub.f32 0.0, %v1779
    %v1908 = vsub.f32 0.0, %v1780
    %v1909 = vsub.f32 0.0, %v1781
    %v1910 = vsub.f32 0.0, %v1782
    %v1911 = vsub.f32 0.0, %v1783
    %v1912 = vsub.f32 0.0, %v1784
    %v1913 = vsub.f32 0.0, %v1785
    %v1914 = vsub.f32 0.0, %v1786
    %v1915 = vsub.f32 0.0, %v1787
    %v1916 = vsub.f32 0.0, %v1788
    %v1917 = vsub.f32 0.0, %v1789
    %v1918 = vsub.f32 0.0, %v1790
    %v1919 = vsub.f32 0.0, %v1791
    %v1920 = vsub.f32 0.0, %v1792
    %v1921 = vsub.f32 0.0, %v1793
    %v1922 = vsub.f32 0.0, %v1794
    %v1923 = vsub.f32 0.0, %v1795
    %v1924 = vsub.f32 0.0, %v1796
    %v1925 = vsub.f32 0.0, %v1797
    %v1926 = vsub.f32 0.0, %v1798
    %v1927 = vsub.f32 0.0, %v1799
    %v1928 = vsub.f32 0.0, %v1800
    %v1929 = vsub.f32 0.0, %v1801
    %v1930 = vsub.f32 0.0, %v1802
    %v1931 = vsub.f32 0.0, %v1803
    %v1932 = vsub.f32 0.0, %v1804
    %v1933 = vsub.f32 0.0, %v1805
    %v1934 = vsub.f32 0.0, %v1806
    %v1935 = vsub.f32 0.0, %v1807
    %v1936 = vsub.f32 0.0, %v1808
    %v1937 = vsub.f32 0.0, %v1809
    %v1938 = vsub.f32 0.0, %v1810
    %v1939 = vsub.f32 0.0, %v1811
    %v1940 = vsub.f32 0.0, %v1812
    %v1941 = vsub.f32 0.0, %v1813
    %v1942 = vsub.f32 0.0, %v1814
    %v1943 = vsub.f32 0.0, %v1815
    %v1944 = vsub.f32 0.0, %v1816
    %v1945 = vsub.f32 0.0, %v1817
    %v1946 = vsub.f32 0.0, %v1818
    %v1947 = vsub.f32 0.0, %v1819
    %v1948 = vsub.f32 0.0, %v1820
    %v1949 = vsub.f32 0.0, %v1821
    %v1950 = vsub.f32 0.0, %v1822
    %v1951 = vsub.f32 0.0, %v1823
    %v1952 = vsub.f32 0.0, %v1824
    %v1953 = vsub.f32 0.0, %v1825
    %v1954 = vsub.f32 0.0, %v1826
    %v1955 = vsub.f32 0.0, %v1827
    %v1956 = vsub.f32 0.0, %v1828
    %v1957 = vsub.f32 0.0, %v1829
    %v1958 = vsub.f32 0.0, %v1830
    %v1959 = vsub.f32 0.0, %v1831
    %v1960 = vsub.f32 0.0, %v1832
    %v1961 = vsub.f32 0.0, %v1833
    %v1962 = vsub.f32 0.0, %v1834
    %v1963 = vsub.f32 0.0, %v1835
    %v1964 = vsub.f32 0.0, %v1836
    %v1965 = vsub.f32 0.0, %v1837
    %v1966 = vsub.f32 0.0, %v1838
    %v1967 = vsub.f32 0.0, %v1839
    %v1968 = vsub.f32 0.0, %v1840
    %v1969 = vsub.f32 0.0, %v1841
    %v1970 = vsub.f32 0.0, %v1842
    %v1971 = vsub.f32 0.0, %v1843
    %v1972 = vsub.f32 0.0, %v1844
    %v1973 = vsub.f32 0.0, %v1845
    %v1974 = vsub.f32 0.0, %v1846
    %v1975 = vsub.f32 0.0, %v1847
    %v1976 = vsub.f32 0.0, %v1848
    %v1977 = vsub.f32 0.0, %v1849
    %v1978 = vmul.f32 %v1850, 1.442695
    %v1979 = vpow.pop %v1978
    %v1980 = vmul.f32 %v1851, 1.442695
    %v1981 = vpow.pop %v1980
    %v1982 = vmul.f32 %v1852, 1.442695
    %v1983 = vpow.pop %v1982
    %v1984 = vmul.f32 %v1853, 1.442695
    %v1985 = vpow.pop %v1984
    %v1986 = vmul.f32 %v1854, 1.442695
    %v1987 = vpow.pop %v1986
    %v1988 = vmul.f32 %v1855, 1.442695
    %v1989 = vpow.pop %v1988
    %v1990 = vmul.f32 %v1856, 1.442695
    %v1991 = vpow.pop %v1990
    %v1992 = vmul.f32 %v1857, 1.442695
    %v1993 = vpow.pop %v1992
    %v1994 = vmul.f32 %v1858, 1.442695
    %v1995 = vpow.pop %v1994
    %v1996 = vmul.f32 %v1859, 1.442695
    %v1997 = vpow.pop %v1996
    %v1998 = vmul.f32 %v1860, 1.442695
    %v1999 = vpow.pop %v1998
    %v2000 = vmul.f32 %v1861, 1.442695
    %v2001 = vpow.pop %v2000
    %v2002 = vmul.f32 %v1862, 1.442695
    %v2003 = vpow.pop %v2002
    %v2004 = vmul.f32 %v1863, 1.442695
    %v2005 = vpow.pop %v2004
    %v2006 = vmul.f32 %v1864, 1.442695
    %v2007 = vpow.pop %v2006
    %v2008 = vmul.f32 %v1865, 1.442695
    %v2009 = vpow.pop %v2008
    %v2010 = vmul.f32 %v1866, 1.442695
    %v2011 = vpow.pop %v2010
    %v2012 = vmul.f32 %v1867, 1.442695
    %v2013 = vpow.pop %v2012
    %v2014 = vmul.f32 %v1868, 1.442695
    %v2015 = vpow.pop %v2014
    %v2016 = vmul.f32 %v1869, 1.442695
    %v2017 = vpow.pop %v2016
    %v2018 = vmul.f32 %v1870, 1.442695
    %v2019 = vpow.pop %v2018
    %v2020 = vmul.f32 %v1871, 1.442695
    %v2021 = vpow.pop %v2020
    %v2022 = vmul.f32 %v1872, 1.442695
    %v2023 = vpow.pop %v2022
    %v2024 = vmul.f32 %v1873, 1.442695
    %v2025 = vpow.pop %v2024
    %v2026 = vmul.f32 %v1874, 1.442695
    %v2027 = vpow.pop %v2026
    %v2028 = vmul.f32 %v1875, 1.442695
    %v2029 = vpow.pop %v2028
    %v2030 = vmul.f32 %v1876, 1.442695
    %v2031 = vpow.pop %v2030
    %v2032 = vmul.f32 %v1877, 1.442695
    %v2033 = vpow.pop %v2032
    %v2034 = vmul.f32 %v1878, 1.442695
    %v2035 = vpow.pop %v2034
    %v2036 = vmul.f32 %v1879, 1.442695
    %v2037 = vpow.pop %v2036
    %v2038 = vmul.f32 %v1880, 1.442695
    %v2039 = vpow.pop %v2038
    %v2040 = vmul.f32 %v1881, 1.442695
    %v2041 = vpow.pop %v2040
    %v2042 = vmul.f32 %v1882, 1.442695
    %v2043 = vpow.pop %v2042
    %v2044 = vmul.f32 %v1883, 1.442695
    %v2045 = vpow.pop %v2044
    %v2046 = vmul.f32 %v1884, 1.442695
    %v2047 = vpow.pop %v2046
    %v2048 = vmul.f32 %v1885, 1.442695
    %v2049 = vpow.pop %v2048
    %v2050 = vmul.f32 %v1886, 1.442695
    %v2051 = vpow.pop %v2050
    %v2052 = vmul.f32 %v1887, 1.442695
    %v2053 = vpow.pop %v2052
    %v2054 = vmul.f32 %v1888, 1.442695
    %v2055 = vpow.pop %v2054
    %v2056 = vmul.f32 %v1889, 1.442695
    %v2057 = vpow.pop %v2056
    %v2058 = vmul.f32 %v1890, 1.442695
    %v2059 = vpow.pop %v2058
    %v2060 = vmul.f32 %v1891, 1.442695
    %v2061 = vpow.pop %v2060
    %v2062 = vmul.f32 %v1892, 1.442695
    %v2063 = vpow.pop %v2062
    %v2064 = vmul.f32 %v1893, 1.442695
    %v2065 = vpow.pop %v2064
    %v2066 = vmul.f32 %v1894, 1.442695
    %v2067 = vpow.pop %v2066
    %v2068 = vmul.f32 %v1895, 1.442695
    %v2069 = vpow.pop %v2068
    %v2070 = vmul.f32 %v1896, 1.442695
    %v2071 = vpow.pop %v2070
    %v2072 = vmul.f32 %v1897, 1.442695
    %v2073 = vpow.pop %v2072
    %v2074 = vmul.f32 %v1898, 1.442695
    %v2075 = vpow.pop %v2074
    %v2076 = vmul.f32 %v1899, 1.442695
    %v2077 = vpow.pop %v2076
    %v2078 = vmul.f32 %v1900, 1.442695
    %v2079 = vpow.pop %v2078
    %v2080 = vmul.f32 %v1901, 1.442695
    %v2081 = vpow.pop %v2080
    %v2082 = vmul.f32 %v1902, 1.442695
    %v2083 = vpow.pop %v2082
    %v2084 = vmul.f32 %v1903, 1.442695
    %v2085 = vpow.pop %v2084
    %v2086 = vmul.f32 %v1904, 1.442695
    %v2087 = vpow.pop %v2086
    %v2088 = vmul.f32 %v1905, 1.442695
    %v2089 = vpow.pop %v2088
    %v2090 = vmul.f32 %v1906, 1.442695
    %v2091 = vpow.pop %v2090
    %v2092 = vmul.f32 %v1907, 1.442695
    %v2093 = vpow.pop %v2092
    %v2094 = vmul.f32 %v1908, 1.442695
    %v2095 = vpow.pop %v2094
    %v2096 = vmul.f32 %v1909, 1.442695
    %v2097 = vpow.pop %v2096
    %v2098 = vmul.f32 %v1910, 1.442695
    %v2099 = vpow.pop %v2098
    %v2100 = vmul.f32 %v1911, 1.442695
    %v2101 = vpow.pop %v2100
    %v2102 = vmul.f32 %v1912, 1.442695
    %v2103 = vpow.pop %v2102
    %v2104 = vmul.f32 %v1913, 1.442695
    %v2105 = vpow.pop %v2104
    %v2106 = vmul.f32 %v1914, 1.442695
    %v2107 = vpow.pop %v2106
    %v2108 = vmul.f32 %v1915, 1.442695
    %v2109 = vpow.pop %v2108
    %v2110 = vmul.f32 %v1916, 1.442695
    %v2111 = vpow.pop %v2110
    %v2112 = vmul.f32 %v1917, 1.442695
    %v2113 = vpow.pop %v2112
    %v2114 = vmul.f32 %v1918, 1.442695
    %v2115 = vpow.pop %v2114
    %v2116 = vmul.f32 %v1919, 1.442695
    %v2117 = vpow.pop %v2116
    %v2118 = vmul.f32 %v1920, 1.442695
    %v2119 = vpow.pop %v2118
    %v2120 = vmul.f32 %v1921, 1.442695
    %v2121 = vpow.pop %v2120
    %v2122 = vmul.f32 %v1922, 1.442695
    %v2123 = vpow.pop %v2122
    %v2124 = vmul.f32 %v1923, 1.442695
    %v2125 = vpow.pop %v2124
    %v2126 = vmul.f32 %v1924, 1.442695
    %v2127 = vpow.pop %v2126
    %v2128 = vmul.f32 %v1925, 1.442695
    %v2129 = vpow.pop %v2128
    %v2130 = vmul.f32 %v1926, 1.442695
    %v2131 = vpow.pop %v2130
    %v2132 = vmul.f32 %v1927, 1.442695
    %v2133 = vpow.pop %v2132
    %v2134 = vmul.f32 %v1928, 1.442695
    %v2135 = vpow.pop %v2134
    %v2136 = vmul.f32 %v1929, 1.442695
    %v2137 = vpow.pop %v2136
    %v2138 = vmul.f32 %v1930, 1.442695
    %v2139 = vpow.pop %v2138
    %v2140 = vmul.f32 %v1931, 1.442695
    %v2141 = vpow.pop %v2140
    %v2142 = vmul.f32 %v1932, 1.442695
    %v2143 = vpow.pop %v2142
    %v2144 = vmul.f32 %v1933, 1.442695
    %v2145 = vpow.pop %v2144
    %v2146 = vmul.f32 %v1934, 1.442695
    %v2147 = vpow.pop %v2146
    %v2148 = vmul.f32 %v1935, 1.442695
    %v2149 = vpow.pop %v2148
    %v2150 = vmul.f32 %v1936, 1.442695
    %v2151 = vpow.pop %v2150
    %v2152 = vmul.f32 %v1937, 1.442695
    %v2153 = vpow.pop %v2152
    %v2154 = vmul.f32 %v1938, 1.442695
    %v2155 = vpow.pop %v2154
    %v2156 = vmul.f32 %v1939, 1.442695
    %v2157 = vpow.pop %v2156
    %v2158 = vmul.f32 %v1940, 1.442695
    %v2159 = vpow.pop %v2158
    %v2160 = vmul.f32 %v1941, 1.442695
    %v2161 = vpow.pop %v2160
    %v2162 = vmul.f32 %v1942, 1.442695
    %v2163 = vpow.pop %v2162
    %v2164 = vmul.f32 %v1943, 1.442695
    %v2165 = vpow.pop %v2164
    %v2166 = vmul.f32 %v1944, 1.442695
    %v2167 = vpow.pop %v2166
    %v2168 = vmul.f32 %v1945, 1.442695
    %v2169 = vpow.pop %v2168
    %v2170 = vmul.f32 %v1946, 1.442695
    %v2171 = vpow.pop %v2170
    %v2172 = vmul.f32 %v1947, 1.442695
    %v2173 = vpow.pop %v2172
    %v2174 = vmul.f32 %v1948, 1.442695
    %v2175 = vpow.pop %v2174
    %v2176 = vmul.f32 %v1949, 1.442695
    %v2177 = vpow.pop %v2176
    %v2178 = vmul.f32 %v1950, 1.442695
    %v2179 = vpow.pop %v2178
    %v2180 = vmul.f32 %v1951, 1.442695
    %v2181 = vpow.pop %v2180
    %v2182 = vmul.f32 %v1952, 1.442695
    %v2183 = vpow.pop %v2182
    %v2184 = vmul.f32 %v1953, 1.442695
    %v2185 = vpow.pop %v2184
    %v2186 = vmul.f32 %v1954, 1.442695
    %v2187 = vpow.pop %v2186
    %v2188 = vmul.f32 %v1955, 1.442695
    %v2189 = vpow.pop %v2188
    %v2190 = vmul.f32 %v1956, 1.442695
    %v2191 = vpow.pop %v2190
    %v2192 = vmul.f32 %v1957, 1.442695
    %v2193 = vpow.pop %v2192
    %v2194 = vmul.f32 %v1958, 1.442695
    %v2195 = vpow.pop %v2194
    %v2196 = vmul.f32 %v1959, 1.442695
    %v2197 = vpow.pop %v2196
    %v2198 = vmul.f32 %v1960, 1.442695
    %v2199 = vpow.pop %v2198
    %v2200 = vmul.f32 %v1961, 1.442695
    %v2201 = vpow.pop %v2200
    %v2202 = vmul.f32 %v1962, 1.442695
    %v2203 = vpow.pop %v2202
    %v2204 = vmul.f32 %v1963, 1.442695
    %v2205 = vpow.pop %v2204
    %v2206 = vmul.f32 %v1964, 1.442695
    %v2207 = vpow.pop %v2206
    %v2208 = vmul.f32 %v1965, 1.442695
    %v2209 = vpow.pop %v2208
    %v2210 = vmul.f32 %v1966, 1.442695
    %v2211 = vpow.pop %v2210
    %v2212 = vmul.f32 %v1967, 1.442695
    %v2213 = vpow.pop %v2212
    %v2214 = vmul.f32 %v1968, 1.442695
    %v2215 = vpow.pop %v2214
    %v2216 = vmul.f32 %v1969, 1.442695
    %v2217 = vpow.pop %v2216
    %v2218 = vmul.f32 %v1970, 1.442695
    %v2219 = vpow.pop %v2218
    %v2220 = vmul.f32 %v1971, 1.442695
    %v2221 = vpow.pop %v2220
    %v2222 = vmul.f32 %v1972, 1.442695
    %v2223 = vpow.pop %v2222
    %v2224 = vmul.f32 %v1973, 1.442695
    %v2225 = vpow.pop %v2224
    %v2226 = vmul.f32 %v1974, 1.442695
    %v2227 = vpow.pop %v2226
    %v2228 = vmul.f32 %v1975, 1.442695
    %v2229 = vpow.pop %v2228
    %v2230 = vmul.f32 %v1976, 1.442695
    %v2231 = vpow.pop %v2230
    %v2232 = vmul.f32 %v1977, 1.442695
    %v2233 = vpow.pop %v2232
    %v2234 = vadd.f32 %v1979, 1.0
    %v2235 = vadd.f32 %v1981, 1.0
    %v2236 = vadd.f32 %v1983, 1.0
    %v2237 = vadd.f32 %v1985, 1.0
    %v2238 = vadd.f32 %v1987, 1.0
    %v2239 = vadd.f32 %v1989, 1.0
    %v2240 = vadd.f32 %v1991, 1.0
    %v2241 = vadd.f32 %v1993, 1.0
    %v2242 = vadd.f32 %v1995, 1.0
    %v2243 = vadd.f32 %v1997, 1.0
    %v2244 = vadd.f32 %v1999, 1.0
    %v2245 = vadd.f32 %v2001, 1.0
    %v2246 = vadd.f32 %v2003, 1.0
    %v2247 = vadd.f32 %v2005, 1.0
    %v2248 = vadd.f32 %v2007, 1.0
    %v2249 = vadd.f32 %v2009, 1.0
    %v2250 = vadd.f32 %v2011, 1.0
    %v2251 = vadd.f32 %v2013, 1.0
    %v2252 = vadd.f32 %v2015, 1.0
    %v2253 = vadd.f32 %v2017, 1.0
    %v2254 = vadd.f32 %v2019, 1.0
    %v2255 = vadd.f32 %v2021, 1.0
    %v2256 = vadd.f32 %v2023, 1.0
    %v2257 = vadd.f32 %v2025, 1.0
    %v2258 = vadd.f32 %v2027, 1.0
    %v2259 = vadd.f32 %v2029, 1.0
    %v2260 = vadd.f32 %v2031, 1.0
    %v2261 = vadd.f32 %v2033, 1.0
    %v2262 = vadd.f32 %v2035, 1.0
    %v2263 = vadd.f32 %v2037, 1.0
    %v2264 = vadd.f32 %v2039, 1.0
    %v2265 = vadd.f32 %v2041, 1.0
    %v2266 = vadd.f32 %v2043, 1.0
    %v2267 = vadd.f32 %v2045, 1.0
    %v2268 = vadd.f32 %v2047, 1.0
    %v2269 = vadd.f32 %v2049, 1.0
    %v2270 = vadd.f32 %v2051, 1.0
    %v2271 = vadd.f32 %v2053, 1.0
    %v2272 = vadd.f32 %v2055, 1.0
    %v2273 = vadd.f32 %v2057, 1.0
    %v2274 = vadd.f32 %v2059, 1.0
    %v2275 = vadd.f32 %v2061, 1.0
    %v2276 = vadd.f32 %v2063, 1.0
    %v2277 = vadd.f32 %v2065, 1.0
    %v2278 = vadd.f32 %v2067, 1.0
    %v2279 = vadd.f32 %v2069, 1.0
    %v2280 = vadd.f32 %v2071, 1.0
    %v2281 = vadd.f32 %v2073, 1.0
    %v2282 = vadd.f32 %v2075, 1.0
    %v2283 = vadd.f32 %v2077, 1.0
    %v2284 = vadd.f32 %v2079, 1.0
    %v2285 = vadd.f32 %v2081, 1.0
    %v2286 = vadd.f32 %v2083, 1.0
    %v2287 = vadd.f32 %v2085, 1.0
    %v2288 = vadd.f32 %v2087, 1.0
    %v2289 = vadd.f32 %v2089, 1.0
    %v2290 = vadd.f32 %v2091, 1.0
    %v2291 = vadd.f32 %v2093, 1.0
    %v2292 = vadd.f32 %v2095, 1.0
    %v2293 = vadd.f32 %v2097, 1.0
    %v2294 = vadd.f32 %v2099, 1.0
    %v2295 = vadd.f32 %v2101, 1.0
    %v2296 = vadd.f32 %v2103, 1.0
    %v2297 = vadd.f32 %v2105, 1.0
    %v2298 = vadd.f32 %v2107, 1.0
    %v2299 = vadd.f32 %v2109, 1.0
    %v2300 = vadd.f32 %v2111, 1.0
    %v2301 = vadd.f32 %v2113, 1.0
    %v2302 = vadd.f32 %v2115, 1.0
    %v2303 = vadd.f32 %v2117, 1.0
    %v2304 = vadd.f32 %v2119, 1.0
    %v2305 = vadd.f32 %v2121, 1.0
    %v2306 = vadd.f32 %v2123, 1.0
    %v2307 = vadd.f32 %v2125, 1.0
    %v2308 = vadd.f32 %v2127, 1.0
    %v2309 = vadd.f32 %v2129, 1.0
    %v2310 = vadd.f32 %v2131, 1.0
    %v2311 = vadd.f32 %v2133, 1.0
    %v2312 = vadd.f32 %v2135, 1.0
    %v2313 = vadd.f32 %v2137, 1.0
    %v2314 = vadd.f32 %v2139, 1.0
    %v2315 = vadd.f32 %v2141, 1.0
    %v2316 = vadd.f32 %v2143, 1.0
    %v2317 = vadd.f32 %v2145, 1.0
    %v2318 = vadd.f32 %v2147, 1.0
    %v2319 = vadd.f32 %v2149, 1.0
    %v2320 = vadd.f32 %v2151, 1.0
    %v2321 = vadd.f32 %v2153, 1.0
    %v2322 = vadd.f32 %v2155, 1.0
    %v2323 = vadd.f32 %v2157, 1.0
    %v2324 = vadd.f32 %v2159, 1.0
    %v2325 = vadd.f32 %v2161, 1.0
    %v2326 = vadd.f32 %v2163, 1.0
    %v2327 = vadd.f32 %v2165, 1.0
    %v2328 = vadd.f32 %v2167, 1.0
    %v2329 = vadd.f32 %v2169, 1.0
    %v2330 = vadd.f32 %v2171, 1.0
    %v2331 = vadd.f32 %v2173, 1.0
    %v2332 = vadd.f32 %v2175, 1.0
    %v2333 = vadd.f32 %v2177, 1.0
    %v2334 = vadd.f32 %v2179, 1.0
    %v2335 = vadd.f32 %v2181, 1.0
    %v2336 = vadd.f32 %v2183, 1.0
    %v2337 = vadd.f32 %v2185, 1.0
    %v2338 = vadd.f32 %v2187, 1.0
    %v2339 = vadd.f32 %v2189, 1.0
    %v2340 = vadd.f32 %v2191, 1.0
    %v2341 = vadd.f32 %v2193, 1.0
    %v2342 = vadd.f32 %v2195, 1.0
    %v2343 = vadd.f32 %v2197, 1.0
    %v2344 = vadd.f32 %v2199, 1.0
    %v2345 = vadd.f32 %v2201, 1.0
    %v2346 = vadd.f32 %v2203, 1.0
    %v2347 = vadd.f32 %v2205, 1.0
    %v2348 = vadd.f32 %v2207, 1.0
    %v2349 = vadd.f32 %v2209, 1.0
    %v2350 = vadd.f32 %v2211, 1.0
    %v2351 = vadd.f32 %v2213, 1.0
    %v2352 = vadd.f32 %v2215, 1.0
    %v2353 = vadd.f32 %v2217, 1.0
    %v2354 = vadd.f32 %v2219, 1.0
    %v2355 = vadd.f32 %v2221, 1.0
    %v2356 = vadd.f32 %v2223, 1.0
    %v2357 = vadd.f32 %v2225, 1.0
    %v2358 = vadd.f32 %v2227, 1.0
    %v2359 = vadd.f32 %v2229, 1.0
    %v2360 = vadd.f32 %v2231, 1.0
    %v2361 = vadd.f32 %v2233, 1.0
    %v2362 = vlog2.pop %v2234
    %v2363 = vmul.f32 %v2362, 0.6931472
    %v2364 = vlog2.pop %v2235
    %v2365 = vmul.f32 %v2364, 0.6931472
    %v2366 = vlog2.pop %v2236
    %v2367 = vmul.f32 %v2366, 0.6931472
    %v2368 = vlog2.pop %v2237
    %v2369 = vmul.f32 %v2368, 0.6931472
    %v2370 = vlog2.pop %v2238
    %v2371 = vmul.f32 %v2370, 0.6931472
    %v2372 = vlog2.pop %v2239
    %v2373 = vmul.f32 %v2372, 0.6931472
    %v2374 = vlog2.pop %v2240
    %v2375 = vmul.f32 %v2374, 0.6931472
    %v2376 = vlog2.pop %v2241
    %v2377 = vmul.f32 %v2376, 0.6931472
    %v2378 = vlog2.pop %v2242
    %v2379 = vmul.f32 %v2378, 0.6931472
    %v2380 = vlog2.pop %v2243
    %v2381 = vmul.f32 %v2380, 0.6931472
    %v2382 = vlog2.pop %v2244
    %v2383 = vmul.f32 %v2382, 0.6931472
    %v2384 = vlog2.pop %v2245
    %v2385 = vmul.f32 %v2384, 0.6931472
    %v2386 = vlog2.pop %v2246
    %v2387 = vmul.f32 %v2386, 0.6931472
    %v2388 = vlog2.pop %v2247
    %v2389 = vmul.f32 %v2388, 0.6931472
    %v2390 = vlog2.pop %v2248
    %v2391 = vmul.f32 %v2390, 0.6931472
    %v2392 = vlog2.pop %v2249
    %v2393 = vmul.f32 %v2392, 0.6931472
    %v2394 = vlog2.pop %v2250
    %v2395 = vmul.f32 %v2394, 0.6931472
    %v2396 = vlog2.pop %v2251
    %v2397 = vmul.f32 %v2396, 0.6931472
    %v2398 = vlog2.pop %v2252
    %v2399 = vmul.f32 %v2398, 0.6931472
    %v2400 = vlog2.pop %v2253
    %v2401 = vmul.f32 %v2400, 0.6931472
    %v2402 = vlog2.pop %v2254
    %v2403 = vmul.f32 %v2402, 0.6931472
    %v2404 = vlog2.pop %v2255
    %v2405 = vmul.f32 %v2404, 0.6931472
    %v2406 = vlog2.pop %v2256
    %v2407 = vmul.f32 %v2406, 0.6931472
    %v2408 = vlog2.pop %v2257
    %v2409 = vmul.f32 %v2408, 0.6931472
    %v2410 = vlog2.pop %v2258
    %v2411 = vmul.f32 %v2410, 0.6931472
    %v2412 = vlog2.pop %v2259
    %v2413 = vmul.f32 %v2412, 0.6931472
    %v2414 = vlog2.pop %v2260
    %v2415 = vmul.f32 %v2414, 0.6931472
    %v2416 = vlog2.pop %v2261
    %v2417 = vmul.f32 %v2416, 0.6931472
    %v2418 = vlog2.pop %v2262
    %v2419 = vmul.f32 %v2418, 0.6931472
    %v2420 = vlog2.pop %v2263
    %v2421 = vmul.f32 %v2420, 0.6931472
    %v2422 = vlog2.pop %v2264
    %v2423 = vmul.f32 %v2422, 0.6931472
    %v2424 = vlog2.pop %v2265
    %v2425 = vmul.f32 %v2424, 0.6931472
    %v2426 = vlog2.pop %v2266
    %v2427 = vmul.f32 %v2426, 0.6931472
    %v2428 = vlog2.pop %v2267
    %v2429 = vmul.f32 %v2428, 0.6931472
    %v2430 = vlog2.pop %v2268
    %v2431 = vmul.f32 %v2430, 0.6931472
    %v2432 = vlog2.pop %v2269
    %v2433 = vmul.f32 %v2432, 0.6931472
    %v2434 = vlog2.pop %v2270
    %v2435 = vmul.f32 %v2434, 0.6931472
    %v2436 = vlog2.pop %v2271
    %v2437 = vmul.f32 %v2436, 0.6931472
    %v2438 = vlog2.pop %v2272
    %v2439 = vmul.f32 %v2438, 0.6931472
    %v2440 = vlog2.pop %v2273
    %v2441 = vmul.f32 %v2440, 0.6931472
    %v2442 = vlog2.pop %v2274
    %v2443 = vmul.f32 %v2442, 0.6931472
    %v2444 = vlog2.pop %v2275
    %v2445 = vmul.f32 %v2444, 0.6931472
    %v2446 = vlog2.pop %v2276
    %v2447 = vmul.f32 %v2446, 0.6931472
    %v2448 = vlog2.pop %v2277
    %v2449 = vmul.f32 %v2448, 0.6931472
    %v2450 = vlog2.pop %v2278
    %v2451 = vmul.f32 %v2450, 0.6931472
    %v2452 = vlog2.pop %v2279
    %v2453 = vmul.f32 %v2452, 0.6931472
    %v2454 = vlog2.pop %v2280
    %v2455 = vmul.f32 %v2454, 0.6931472
    %v2456 = vlog2.pop %v2281
    %v2457 = vmul.f32 %v2456, 0.6931472
    %v2458 = vlog2.pop %v2282
    %v2459 = vmul.f32 %v2458, 0.6931472
    %v2460 = vlog2.pop %v2283
    %v2461 = vmul.f32 %v2460, 0.6931472
    %v2462 = vlog2.pop %v2284
    %v2463 = vmul.f32 %v2462, 0.6931472
    %v2464 = vlog2.pop %v2285
    %v2465 = vmul.f32 %v2464, 0.6931472
    %v2466 = vlog2.pop %v2286
    %v2467 = vmul.f32 %v2466, 0.6931472
    %v2468 = vlog2.pop %v2287
    %v2469 = vmul.f32 %v2468, 0.6931472
    %v2470 = vlog2.pop %v2288
    %v2471 = vmul.f32 %v2470, 0.6931472
    %v2472 = vlog2.pop %v2289
    %v2473 = vmul.f32 %v2472, 0.6931472
    %v2474 = vlog2.pop %v2290
    %v2475 = vmul.f32 %v2474, 0.6931472
    %v2476 = vlog2.pop %v2291
    %v2477 = vmul.f32 %v2476, 0.6931472
    %v2478 = vlog2.pop %v2292
    %v2479 = vmul.f32 %v2478, 0.6931472
    %v2480 = vlog2.pop %v2293
    %v2481 = vmul.f32 %v2480, 0.6931472
    %v2482 = vlog2.pop %v2294
    %v2483 = vmul.f32 %v2482, 0.6931472
    %v2484 = vlog2.pop %v2295
    %v2485 = vmul.f32 %v2484, 0.6931472
    %v2486 = vlog2.pop %v2296
    %v2487 = vmul.f32 %v2486, 0.6931472
    %v2488 = vlog2.pop %v2297
    %v2489 = vmul.f32 %v2488, 0.6931472
    %v2490 = vlog2.pop %v2298
    %v2491 = vmul.f32 %v2490, 0.6931472
    %v2492 = vlog2.pop %v2299
    %v2493 = vmul.f32 %v2492, 0.6931472
    %v2494 = vlog2.pop %v2300
    %v2495 = vmul.f32 %v2494, 0.6931472
    %v2496 = vlog2.pop %v2301
    %v2497 = vmul.f32 %v2496, 0.6931472
    %v2498 = vlog2.pop %v2302
    %v2499 = vmul.f32 %v2498, 0.6931472
    %v2500 = vlog2.pop %v2303
    %v2501 = vmul.f32 %v2500, 0.6931472
    %v2502 = vlog2.pop %v2304
    %v2503 = vmul.f32 %v2502, 0.6931472
    %v2504 = vlog2.pop %v2305
    %v2505 = vmul.f32 %v2504, 0.6931472
    %v2506 = vlog2.pop %v2306
    %v2507 = vmul.f32 %v2506, 0.6931472
    %v2508 = vlog2.pop %v2307
    %v2509 = vmul.f32 %v2508, 0.6931472
    %v2510 = vlog2.pop %v2308
    %v2511 = vmul.f32 %v2510, 0.6931472
    %v2512 = vlog2.pop %v2309
    %v2513 = vmul.f32 %v2512, 0.6931472
    %v2514 = vlog2.pop %v2310
    %v2515 = vmul.f32 %v2514, 0.6931472
    %v2516 = vlog2.pop %v2311
    %v2517 = vmul.f32 %v2516, 0.6931472
    %v2518 = vlog2.pop %v2312
    %v2519 = vmul.f32 %v2518, 0.6931472
    %v2520 = vlog2.pop %v2313
    %v2521 = vmul.f32 %v2520, 0.6931472
    %v2522 = vlog2.pop %v2314
    %v2523 = vmul.f32 %v2522, 0.6931472
    %v2524 = vlog2.pop %v2315
    %v2525 = vmul.f32 %v2524, 0.6931472
    %v2526 = vlog2.pop %v2316
    %v2527 = vmul.f32 %v2526, 0.6931472
    %v2528 = vlog2.pop %v2317
    %v2529 = vmul.f32 %v2528, 0.6931472
    %v2530 = vlog2.pop %v2318
    %v2531 = vmul.f32 %v2530, 0.6931472
    %v2532 = vlog2.pop %v2319
    %v2533 = vmul.f32 %v2532, 0.6931472
    %v2534 = vlog2.pop %v2320
    %v2535 = vmul.f32 %v2534, 0.6931472
    %v2536 = vlog2.pop %v2321
    %v2537 = vmul.f32 %v2536, 0.6931472
    %v2538 = vlog2.pop %v2322
    %v2539 = vmul.f32 %v2538, 0.6931472
    %v2540 = vlog2.pop %v2323
    %v2541 = vmul.f32 %v2540, 0.6931472
    %v2542 = vlog2.pop %v2324
    %v2543 = vmul.f32 %v2542, 0.6931472
    %v2544 = vlog2.pop %v2325
    %v2545 = vmul.f32 %v2544, 0.6931472
    %v2546 = vlog2.pop %v2326
    %v2547 = vmul.f32 %v2546, 0.6931472
    %v2548 = vlog2.pop %v2327
    %v2549 = vmul.f32 %v2548, 0.6931472
    %v2550 = vlog2.pop %v2328
    %v2551 = vmul.f32 %v2550, 0.6931472
    %v2552 = vlog2.pop %v2329
    %v2553 = vmul.f32 %v2552, 0.6931472
    %v2554 = vlog2.pop %v2330
    %v2555 = vmul.f32 %v2554, 0.6931472
    %v2556 = vlog2.pop %v2331
    %v2557 = vmul.f32 %v2556, 0.6931472
    %v2558 = vlog2.pop %v2332
    %v2559 = vmul.f32 %v2558, 0.6931472
    %v2560 = vlog2.pop %v2333
    %v2561 = vmul.f32 %v2560, 0.6931472
    %v2562 = vlog2.pop %v2334
    %v2563 = vmul.f32 %v2562, 0.6931472
    %v2564 = vlog2.pop %v2335
    %v2565 = vmul.f32 %v2564, 0.6931472
    %v2566 = vlog2.pop %v2336
    %v2567 = vmul.f32 %v2566, 0.6931472
    %v2568 = vlog2.pop %v2337
    %v2569 = vmul.f32 %v2568, 0.6931472
    %v2570 = vlog2.pop %v2338
    %v2571 = vmul.f32 %v2570, 0.6931472
    %v2572 = vlog2.pop %v2339
    %v2573 = vmul.f32 %v2572, 0.6931472
    %v2574 = vlog2.pop %v2340
    %v2575 = vmul.f32 %v2574, 0.6931472
    %v2576 = vlog2.pop %v2341
    %v2577 = vmul.f32 %v2576, 0.6931472
    %v2578 = vlog2.pop %v2342
    %v2579 = vmul.f32 %v2578, 0.6931472
    %v2580 = vlog2.pop %v2343
    %v2581 = vmul.f32 %v2580, 0.6931472
    %v2582 = vlog2.pop %v2344
    %v2583 = vmul.f32 %v2582, 0.6931472
    %v2584 = vlog2.pop %v2345
    %v2585 = vmul.f32 %v2584, 0.6931472
    %v2586 = vlog2.pop %v2346
    %v2587 = vmul.f32 %v2586, 0.6931472
    %v2588 = vlog2.pop %v2347
    %v2589 = vmul.f32 %v2588, 0.6931472
    %v2590 = vlog2.pop %v2348
    %v2591 = vmul.f32 %v2590, 0.6931472
    %v2592 = vlog2.pop %v2349
    %v2593 = vmul.f32 %v2592, 0.6931472
    %v2594 = vlog2.pop %v2350
    %v2595 = vmul.f32 %v2594, 0.6931472
    %v2596 = vlog2.pop %v2351
    %v2597 = vmul.f32 %v2596, 0.6931472
    %v2598 = vlog2.pop %v2352
    %v2599 = vmul.f32 %v2598, 0.6931472
    %v2600 = vlog2.pop %v2353
    %v2601 = vmul.f32 %v2600, 0.6931472
    %v2602 = vlog2.pop %v2354
    %v2603 = vmul.f32 %v2602, 0.6931472
    %v2604 = vlog2.pop %v2355
    %v2605 = vmul.f32 %v2604, 0.6931472
    %v2606 = vlog2.pop %v2356
    %v2607 = vmul.f32 %v2606, 0.6931472
    %v2608 = vlog2.pop %v2357
    %v2609 = vmul.f32 %v2608, 0.6931472
    %v2610 = vlog2.pop %v2358
    %v2611 = vmul.f32 %v2610, 0.6931472
    %v2612 = vlog2.pop %v2359
    %v2613 = vmul.f32 %v2612, 0.6931472
    %v2614 = vlog2.pop %v2360
    %v2615 = vmul.f32 %v2614, 0.6931472
    %v2616 = vlog2.pop %v2361
    %v2617 = vmul.f32 %v2616, 0.6931472
    %v2618 = vmax.f32 %v1594, 0.0
    %v2619 = vmax.f32 %v1595, 0.0
    %v2620 = vmax.f32 %v1596, 0.0
    %v2621 = vmax.f32 %v1597, 0.0
    %v2622 = vmax.f32 %v1598, 0.0
    %v2623 = vmax.f32 %v1599, 0.0
    %v2624 = vmax.f32 %v1600, 0.0
    %v2625 = vmax.f32 %v1601, 0.0
    %v2626 = vmax.f32 %v1602, 0.0
    %v2627 = vmax.f32 %v1603, 0.0
    %v2628 = vmax.f32 %v1604, 0.0
    %v2629 = vmax.f32 %v1605, 0.0
    %v2630 = vmax.f32 %v1606, 0.0
    %v2631 = vmax.f32 %v1607, 0.0
    %v2632 = vmax.f32 %v1608, 0.0
    %v2633 = vmax.f32 %v1609, 0.0
    %v2634 = vmax.f32 %v1610, 0.0
    %v2635 = vmax.f32 %v1611, 0.0
    %v2636 = vmax.f32 %v1612, 0.0
    %v2637 = vmax.f32 %v1613, 0.0
    %v2638 = vmax.f32 %v1614, 0.0
    %v2639 = vmax.f32 %v1615, 0.0
    %v2640 = vmax.f32 %v1616, 0.0
    %v2641 = vmax.f32 %v1617, 0.0
    %v2642 = vmax.f32 %v1618, 0.0
    %v2643 = vmax.f32 %v1619, 0.0
    %v2644 = vmax.f32 %v1620, 0.0
    %v2645 = vmax.f32 %v1621, 0.0
    %v2646 = vmax.f32 %v1622, 0.0
    %v2647 = vmax.f32 %v1623, 0.0
    %v2648 = vmax.f32 %v1624, 0.0
    %v2649 = vmax.f32 %v1625, 0.0
    %v2650 = vmax.f32 %v1626, 0.0
    %v2651 = vmax.f32 %v1627, 0.0
    %v2652 = vmax.f32 %v1628, 0.0
    %v2653 = vmax.f32 %v1629, 0.0
    %v2654 = vmax.f32 %v1630, 0.0
    %v2655 = vmax.f32 %v1631, 0.0
    %v2656 = vmax.f32 %v1632, 0.0
    %v2657 = vmax.f32 %v1633, 0.0
    %v2658 = vmax.f32 %v1634, 0.0
    %v2659 = vmax.f32 %v1635, 0.0
    %v2660 = vmax.f32 %v1636, 0.0
    %v2661 = vmax.f32 %v1637, 0.0
    %v2662 = vmax.f32 %v1638, 0.0
    %v2663 = vmax.f32 %v1639, 0.0
    %v2664 = vmax.f32 %v1640, 0.0
    %v2665 = vmax.f32 %v1641, 0.0
    %v2666 = vmax.f32 %v1642, 0.0
    %v2667 = vmax.f32 %v1643, 0.0
    %v2668 = vmax.f32 %v1644, 0.0
    %v2669 = vmax.f32 %v1645, 0.0
    %v2670 = vmax.f32 %v1646, 0.0
    %v2671 = vmax.f32 %v1647, 0.0
    %v2672 = vmax.f32 %v1648, 0.0
    %v2673 = vmax.f32 %v1649, 0.0
    %v2674 = vmax.f32 %v1650, 0.0
    %v2675 = vmax.f32 %v1651, 0.0
    %v2676 = vmax.f32 %v1652, 0.0
    %v2677 = vmax.f32 %v1653, 0.0
    %v2678 = vmax.f32 %v1654, 0.0
    %v2679 = vmax.f32 %v1655, 0.0
    %v2680 = vmax.f32 %v1656, 0.0
    %v2681 = vmax.f32 %v1657, 0.0
    %v2682 = vmax.f32 %v1658, 0.0
    %v2683 = vmax.f32 %v1659, 0.0
    %v2684 = vmax.f32 %v1660, 0.0
    %v2685 = vmax.f32 %v1661, 0.0
    %v2686 = vmax.f32 %v1662, 0.0
    %v2687 = vmax.f32 %v1663, 0.0
    %v2688 = vmax.f32 %v1664, 0.0
    %v2689 = vmax.f32 %v1665, 0.0
    %v2690 = vmax.f32 %v1666, 0.0
    %v2691 = vmax.f32 %v1667, 0.0
    %v2692 = vmax.f32 %v1668, 0.0
    %v2693 = vmax.f32 %v1669, 0.0
    %v2694 = vmax.f32 %v1670, 0.0
    %v2695 = vmax.f32 %v1671, 0.0
    %v2696 = vmax.f32 %v1672, 0.0
    %v2697 = vmax.f32 %v1673, 0.0
    %v2698 = vmax.f32 %v1674, 0.0
    %v2699 = vmax.f32 %v1675, 0.0
    %v2700 = vmax.f32 %v1676, 0.0
    %v2701 = vmax.f32 %v1677, 0.0
    %v2702 = vmax.f32 %v1678, 0.0
    %v2703 = vmax.f32 %v1679, 0.0
    %v2704 = vmax.f32 %v1680, 0.0
    %v2705 = vmax.f32 %v1681, 0.0
    %v2706 = vmax.f32 %v1682, 0.0
    %v2707 = vmax.f32 %v1683, 0.0
    %v2708 = vmax.f32 %v1684, 0.0
    %v2709 = vmax.f32 %v1685, 0.0
    %v2710 = vmax.f32 %v1686, 0.0
    %v2711 = vmax.f32 %v1687, 0.0
    %v2712 = vmax.f32 %v1688, 0.0
    %v2713 = vmax.f32 %v1689, 0.0
    %v2714 = vmax.f32 %v1690, 0.0
    %v2715 = vmax.f32 %v1691, 0.0
    %v2716 = vmax.f32 %v1692, 0.0
    %v2717 = vmax.f32 %v1693, 0.0
    %v2718 = vmax.f32 %v1694, 0.0
    %v2719 = vmax.f32 %v1695, 0.0
    %v2720 = vmax.f32 %v1696, 0.0
    %v2721 = vmax.f32 %v1697, 0.0
    %v2722 = vmax.f32 %v1698, 0.0
    %v2723 = vmax.f32 %v1699, 0.0
    %v2724 = vmax.f32 %v1700, 0.0
    %v2725 = vmax.f32 %v1701, 0.0
    %v2726 = vmax.f32 %v1702, 0.0
    %v2727 = vmax.f32 %v1703, 0.0
    %v2728 = vmax.f32 %v1704, 0.0
    %v2729 = vmax.f32 %v1705, 0.0
    %v2730 = vmax.f32 %v1706, 0.0
    %v2731 = vmax.f32 %v1707, 0.0
    %v2732 = vmax.f32 %v1708, 0.0
    %v2733 = vmax.f32 %v1709, 0.0
    %v2734 = vmax.f32 %v1710, 0.0
    %v2735 = vmax.f32 %v1711, 0.0
    %v2736 = vmax.f32 %v1712, 0.0
    %v2737 = vmax.f32 %v1713, 0.0
    %v2738 = vmax.f32 %v1714, 0.0
    %v2739 = vmax.f32 %v1715, 0.0
    %v2740 = vmax.f32 %v1716, 0.0
    %v2741 = vmax.f32 %v1717, 0.0
    %v2742 = vmax.f32 %v1718, 0.0
    %v2743 = vmax.f32 %v1719, 0.0
    %v2744 = vmax.f32 %v1720, 0.0
    %v2745 = vmax.f32 %v1721, 0.0
    %v2746 = vadd.f32 %v2618, %v2363
    %v2747 = vadd.f32 %v2619, %v2365
    %v2748 = vadd.f32 %v2620, %v2367
    %v2749 = vadd.f32 %v2621, %v2369
    %v2750 = vadd.f32 %v2622, %v2371
    %v2751 = vadd.f32 %v2623, %v2373
    %v2752 = vadd.f32 %v2624, %v2375
    %v2753 = vadd.f32 %v2625, %v2377
    %v2754 = vadd.f32 %v2626, %v2379
    %v2755 = vadd.f32 %v2627, %v2381
    %v2756 = vadd.f32 %v2628, %v2383
    %v2757 = vadd.f32 %v2629, %v2385
    %v2758 = vadd.f32 %v2630, %v2387
    %v2759 = vadd.f32 %v2631, %v2389
    %v2760 = vadd.f32 %v2632, %v2391
    %v2761 = vadd.f32 %v2633, %v2393
    %v2762 = vadd.f32 %v2634, %v2395
    %v2763 = vadd.f32 %v2635, %v2397
    %v2764 = vadd.f32 %v2636, %v2399
    %v2765 = vadd.f32 %v2637, %v2401
    %v2766 = vadd.f32 %v2638, %v2403
    %v2767 = vadd.f32 %v2639, %v2405
    %v2768 = vadd.f32 %v2640, %v2407
    %v2769 = vadd.f32 %v2641, %v2409
    %v2770 = vadd.f32 %v2642, %v2411
    %v2771 = vadd.f32 %v2643, %v2413
    %v2772 = vadd.f32 %v2644, %v2415
    %v2773 = vadd.f32 %v2645, %v2417
    %v2774 = vadd.f32 %v2646, %v2419
    %v2775 = vadd.f32 %v2647, %v2421
    %v2776 = vadd.f32 %v2648, %v2423
    %v2777 = vadd.f32 %v2649, %v2425
    %v2778 = vadd.f32 %v2650, %v2427
    %v2779 = vadd.f32 %v2651, %v2429
    %v2780 = vadd.f32 %v2652, %v2431
    %v2781 = vadd.f32 %v2653, %v2433
    %v2782 = vadd.f32 %v2654, %v2435
    %v2783 = vadd.f32 %v2655, %v2437
    %v2784 = vadd.f32 %v2656, %v2439
    %v2785 = vadd.f32 %v2657, %v2441
    %v2786 = vadd.f32 %v2658, %v2443
    %v2787 = vadd.f32 %v2659, %v2445
    %v2788 = vadd.f32 %v2660, %v2447
    %v2789 = vadd.f32 %v2661, %v2449
    %v2790 = vadd.f32 %v2662, %v2451
    %v2791 = vadd.f32 %v2663, %v2453
    %v2792 = vadd.f32 %v2664, %v2455
    %v2793 = vadd.f32 %v2665, %v2457
    %v2794 = vadd.f32 %v2666, %v2459
    %v2795 = vadd.f32 %v2667, %v2461
    %v2796 = vadd.f32 %v2668, %v2463
    %v2797 = vadd.f32 %v2669, %v2465
    %v2798 = vadd.f32 %v2670, %v2467
    %v2799 = vadd.f32 %v2671, %v2469
    %v2800 = vadd.f32 %v2672, %v2471
    %v2801 = vadd.f32 %v2673, %v2473
    %v2802 = vadd.f32 %v2674, %v2475
    %v2803 = vadd.f32 %v2675, %v2477
    %v2804 = vadd.f32 %v2676, %v2479
    %v2805 = vadd.f32 %v2677, %v2481
    %v2806 = vadd.f32 %v2678, %v2483
    %v2807 = vadd.f32 %v2679, %v2485
    %v2808 = vadd.f32 %v2680, %v2487
    %v2809 = vadd.f32 %v2681, %v2489
    %v2810 = vadd.f32 %v2682, %v2491
    %v2811 = vadd.f32 %v2683, %v2493
    %v2812 = vadd.f32 %v2684, %v2495
    %v2813 = vadd.f32 %v2685, %v2497
    %v2814 = vadd.f32 %v2686, %v2499
    %v2815 = vadd.f32 %v2687, %v2501
    %v2816 = vadd.f32 %v2688, %v2503
    %v2817 = vadd.f32 %v2689, %v2505
    %v2818 = vadd.f32 %v2690, %v2507
    %v2819 = vadd.f32 %v2691, %v2509
    %v2820 = vadd.f32 %v2692, %v2511
    %v2821 = vadd.f32 %v2693, %v2513
    %v2822 = vadd.f32 %v2694, %v2515
    %v2823 = vadd.f32 %v2695, %v2517
    %v2824 = vadd.f32 %v2696, %v2519
    %v2825 = vadd.f32 %v2697, %v2521
    %v2826 = vadd.f32 %v2698, %v2523
    %v2827 = vadd.f32 %v2699, %v2525
    %v2828 = vadd.f32 %v2700, %v2527
    %v2829 = vadd.f32 %v2701, %v2529
    %v2830 = vadd.f32 %v2702, %v2531
    %v2831 = vadd.f32 %v2703, %v2533
    %v2832 = vadd.f32 %v2704, %v2535
    %v2833 = vadd.f32 %v2705, %v2537
    %v2834 = vadd.f32 %v2706, %v2539
    %v2835 = vadd.f32 %v2707, %v2541
    %v2836 = vadd.f32 %v2708, %v2543
    %v2837 = vadd.f32 %v2709, %v2545
    %v2838 = vadd.f32 %v2710, %v2547
    %v2839 = vadd.f32 %v2711, %v2549
    %v2840 = vadd.f32 %v2712, %v2551
    %v2841 = vadd.f32 %v2713, %v2553
    %v2842 = vadd.f32 %v2714, %v2555
    %v2843 = vadd.f32 %v2715, %v2557
    %v2844 = vadd.f32 %v2716, %v2559
    %v2845 = vadd.f32 %v2717, %v2561
    %v2846 = vadd.f32 %v2718, %v2563
    %v2847 = vadd.f32 %v2719, %v2565
    %v2848 = vadd.f32 %v2720, %v2567
    %v2849 = vadd.f32 %v2721, %v2569
    %v2850 = vadd.f32 %v2722, %v2571
    %v2851 = vadd.f32 %v2723, %v2573
    %v2852 = vadd.f32 %v2724, %v2575
    %v2853 = vadd.f32 %v2725, %v2577
    %v2854 = vadd.f32 %v2726, %v2579
    %v2855 = vadd.f32 %v2727, %v2581
    %v2856 = vadd.f32 %v2728, %v2583
    %v2857 = vadd.f32 %v2729, %v2585
    %v2858 = vadd.f32 %v2730, %v2587
    %v2859 = vadd.f32 %v2731, %v2589
    %v2860 = vadd.f32 %v2732, %v2591
    %v2861 = vadd.f32 %v2733, %v2593
    %v2862 = vadd.f32 %v2734, %v2595
    %v2863 = vadd.f32 %v2735, %v2597
    %v2864 = vadd.f32 %v2736, %v2599
    %v2865 = vadd.f32 %v2737, %v2601
    %v2866 = vadd.f32 %v2738, %v2603
    %v2867 = vadd.f32 %v2739, %v2605
    %v2868 = vadd.f32 %v2740, %v2607
    %v2869 = vadd.f32 %v2741, %v2609
    %v2870 = vadd.f32 %v2742, %v2611
    %v2871 = vadd.f32 %v2743, %v2613
    %v2872 = vadd.f32 %v2744, %v2615
    %v2873 = vadd.f32 %v2745, %v2617
    %v2874 = vadd.f32 %v1466, %v2746
    %v2875 = vadd.f32 %v1467, %v2747
    %v2876 = vadd.f32 %v1468, %v2748
    %v2877 = vadd.f32 %v1469, %v2749
    %v2878 = vadd.f32 %v1470, %v2750
    %v2879 = vadd.f32 %v1471, %v2751
    %v2880 = vadd.f32 %v1472, %v2752
    %v2881 = vadd.f32 %v1473, %v2753
    %v2882 = vadd.f32 %v1474, %v2754
    %v2883 = vadd.f32 %v1475, %v2755
    %v2884 = vadd.f32 %v1476, %v2756
    %v2885 = vadd.f32 %v1477, %v2757
    %v2886 = vadd.f32 %v1478, %v2758
    %v2887 = vadd.f32 %v1479, %v2759
    %v2888 = vadd.f32 %v1480, %v2760
    %v2889 = vadd.f32 %v1481, %v2761
    %v2890 = vadd.f32 %v1482, %v2762
    %v2891 = vadd.f32 %v1483, %v2763
    %v2892 = vadd.f32 %v1484, %v2764
    %v2893 = vadd.f32 %v1485, %v2765
    %v2894 = vadd.f32 %v1486, %v2766
    %v2895 = vadd.f32 %v1487, %v2767
    %v2896 = vadd.f32 %v1488, %v2768
    %v2897 = vadd.f32 %v1489, %v2769
    %v2898 = vadd.f32 %v1490, %v2770
    %v2899 = vadd.f32 %v1491, %v2771
    %v2900 = vadd.f32 %v1492, %v2772
    %v2901 = vadd.f32 %v1493, %v2773
    %v2902 = vadd.f32 %v1494, %v2774
    %v2903 = vadd.f32 %v1495, %v2775
    %v2904 = vadd.f32 %v1496, %v2776
    %v2905 = vadd.f32 %v1497, %v2777
    %v2906 = vadd.f32 %v1498, %v2778
    %v2907 = vadd.f32 %v1499, %v2779
    %v2908 = vadd.f32 %v1500, %v2780
    %v2909 = vadd.f32 %v1501, %v2781
    %v2910 = vadd.f32 %v1502, %v2782
    %v2911 = vadd.f32 %v1503, %v2783
    %v2912 = vadd.f32 %v1504, %v2784
    %v2913 = vadd.f32 %v1505, %v2785
    %v2914 = vadd.f32 %v1506, %v2786
    %v2915 = vadd.f32 %v1507, %v2787
    %v2916 = vadd.f32 %v1508, %v2788
    %v2917 = vadd.f32 %v1509, %v2789
    %v2918 = vadd.f32 %v1510, %v2790
    %v2919 = vadd.f32 %v1511, %v2791
    %v2920 = vadd.f32 %v1512, %v2792
    %v2921 = vadd.f32 %v1513, %v2793
    %v2922 = vadd.f32 %v1514, %v2794
    %v2923 = vadd.f32 %v1515, %v2795
    %v2924 = vadd.f32 %v1516, %v2796
    %v2925 = vadd.f32 %v1517, %v2797
    %v2926 = vadd.f32 %v1518, %v2798
    %v2927 = vadd.f32 %v1519, %v2799
    %v2928 = vadd.f32 %v1520, %v2800
    %v2929 = vadd.f32 %v1521, %v2801
    %v2930 = vadd.f32 %v1522, %v2802
    %v2931 = vadd.f32 %v1523, %v2803
    %v2932 = vadd.f32 %v1524, %v2804
    %v2933 = vadd.f32 %v1525, %v2805
    %v2934 = vadd.f32 %v1526, %v2806
    %v2935 = vadd.f32 %v1527, %v2807
    %v2936 = vadd.f32 %v1528, %v2808
    %v2937 = vadd.f32 %v1529, %v2809
    %v2938 = vadd.f32 %v1530, %v2810
    %v2939 = vadd.f32 %v1531, %v2811
    %v2940 = vadd.f32 %v1532, %v2812
    %v2941 = vadd.f32 %v1533, %v2813
    %v2942 = vadd.f32 %v1534, %v2814
    %v2943 = vadd.f32 %v1535, %v2815
    %v2944 = vadd.f32 %v1536, %v2816
    %v2945 = vadd.f32 %v1537, %v2817
    %v2946 = vadd.f32 %v1538, %v2818
    %v2947 = vadd.f32 %v1539, %v2819
    %v2948 = vadd.f32 %v1540, %v2820
    %v2949 = vadd.f32 %v1541, %v2821
    %v2950 = vadd.f32 %v1542, %v2822
    %v2951 = vadd.f32 %v1543, %v2823
    %v2952 = vadd.f32 %v1544, %v2824
    %v2953 = vadd.f32 %v1545, %v2825
    %v2954 = vadd.f32 %v1546, %v2826
    %v2955 = vadd.f32 %v1547, %v2827
    %v2956 = vadd.f32 %v1548, %v2828
    %v2957 = vadd.f32 %v1549, %v2829
    %v2958 = vadd.f32 %v1550, %v2830
    %v2959 = vadd.f32 %v1551, %v2831
    %v2960 = vadd.f32 %v1552, %v2832
    %v2961 = vadd.f32 %v1553, %v2833
    %v2962 = vadd.f32 %v1554, %v2834
    %v2963 = vadd.f32 %v1555, %v2835
    %v2964 = vadd.f32 %v1556, %v2836
    %v2965 = vadd.f32 %v1557, %v2837
    %v2966 = vadd.f32 %v1558, %v2838
    %v2967 = vadd.f32 %v1559, %v2839
    %v2968 = vadd.f32 %v1560, %v2840
    %v2969 = vadd.f32 %v1561, %v2841
    %v2970 = vadd.f32 %v1562, %v2842
    %v2971 = vadd.f32 %v1563, %v2843
    %v2972 = vadd.f32 %v1564, %v2844
    %v2973 = vadd.f32 %v1565, %v2845
    %v2974 = vadd.f32 %v1566, %v2846
    %v2975 = vadd.f32 %v1567, %v2847
    %v2976 = vadd.f32 %v1568, %v2848
    %v2977 = vadd.f32 %v1569, %v2849
    %v2978 = vadd.f32 %v1570, %v2850
    %v2979 = vadd.f32 %v1571, %v2851
    %v2980 = vadd.f32 %v1572, %v2852
    %v2981 = vadd.f32 %v1573, %v2853
    %v2982 = vadd.f32 %v1574, %v2854
    %v2983 = vadd.f32 %v1575, %v2855
    %v2984 = vadd.f32 %v1576, %v2856
    %v2985 = vadd.f32 %v1577, %v2857
    %v2986 = vadd.f32 %v1578, %v2858
    %v2987 = vadd.f32 %v1579, %v2859
    %v2988 = vadd.f32 %v1580, %v2860
    %v2989 = vadd.f32 %v1581, %v2861
    %v2990 = vadd.f32 %v1582, %v2862
    %v2991 = vadd.f32 %v1583, %v2863
    %v2992 = vadd.f32 %v1584, %v2864
    %v2993 = vadd.f32 %v1585, %v2865
    %v2994 = vadd.f32 %v1586, %v2866
    %v2995 = vadd.f32 %v1587, %v2867
    %v2996 = vadd.f32 %v1588, %v2868
    %v2997 = vadd.f32 %v1589, %v2869
    %v2998 = vadd.f32 %v1590, %v2870
    %v2999 = vadd.f32 %v1591, %v2871
    %v3000 = vadd.f32 %v1592, %v2872
    %v3001 = vadd.f32 %v1593, %v2873
    %v3002 = vadd.f32 %v2874, %v2875
    %v3003 = vadd.f32 %v3002, %v2876
    %v3004 = vadd.f32 %v3003, %v2877
    %v3005 = vadd.f32 %v3004, %v2878
    %v3006 = vadd.f32 %v3005, %v2879
    %v3007 = vadd.f32 %v3006, %v2880
    %v3008 = vadd.f32 %v3007, %v2881
    %v3009 = vadd.f32 %v3008, %v2882
    %v3010 = vadd.f32 %v3009, %v2883
    %v3011 = vadd.f32 %v3010, %v2884
    %v3012 = vadd.f32 %v3011, %v2885
    %v3013 = vadd.f32 %v3012, %v2886
    %v3014 = vadd.f32 %v3013, %v2887
    %v3015 = vadd.f32 %v3014, %v2888
    %v3016 = vadd.f32 %v3015, %v2889
    %v3017 = vadd.f32 %v3016, %v2890
    %v3018 = vadd.f32 %v3017, %v2891
    %v3019 = vadd.f32 %v3018, %v2892
    %v3020 = vadd.f32 %v3019, %v2893
    %v3021 = vadd.f32 %v3020, %v2894
    %v3022 = vadd.f32 %v3021, %v2895
    %v3023 = vadd.f32 %v3022, %v2896
    %v3024 = vadd.f32 %v3023, %v2897
    %v3025 = vadd.f32 %v3024, %v2898
    %v3026 = vadd.f32 %v3025, %v2899
    %v3027 = vadd.f32 %v3026, %v2900
    %v3028 = vadd.f32 %v3027, %v2901
    %v3029 = vadd.f32 %v3028, %v2902
    %v3030 = vadd.f32 %v3029, %v2903
    %v3031 = vadd.f32 %v3030, %v2904
    %v3032 = vadd.f32 %v3031, %v2905
    %v3033 = vadd.f32 %v3032, %v2906
    %v3034 = vadd.f32 %v3033, %v2907
    %v3035 = vadd.f32 %v3034, %v2908
    %v3036 = vadd.f32 %v3035, %v2909
    %v3037 = vadd.f32 %v3036, %v2910
    %v3038 = vadd.f32 %v3037, %v2911
    %v3039 = vadd.f32 %v3038, %v2912
    %v3040 = vadd.f32 %v3039, %v2913
    %v3041 = vadd.f32 %v3040, %v2914
    %v3042 = vadd.f32 %v3041, %v2915
    %v3043 = vadd.f32 %v3042, %v2916
    %v3044 = vadd.f32 %v3043, %v2917
    %v3045 = vadd.f32 %v3044, %v2918
    %v3046 = vadd.f32 %v3045, %v2919
    %v3047 = vadd.f32 %v3046, %v2920
    %v3048 = vadd.f32 %v3047, %v2921
    %v3049 = vadd.f32 %v3048, %v2922
    %v3050 = vadd.f32 %v3049, %v2923
    %v3051 = vadd.f32 %v3050, %v2924
    %v3052 = vadd.f32 %v3051, %v2925
    %v3053 = vadd.f32 %v3052, %v2926
    %v3054 = vadd.f32 %v3053, %v2927
    %v3055 = vadd.f32 %v3054, %v2928
    %v3056 = vadd.f32 %v3055, %v2929
    %v3057 = vadd.f32 %v3056, %v2930
    %v3058 = vadd.f32 %v3057, %v2931
    %v3059 = vadd.f32 %v3058, %v2932
    %v3060 = vadd.f32 %v3059, %v2933
    %v3061 = vadd.f32 %v3060, %v2934
    %v3062 = vadd.f32 %v3061, %v2935
    %v3063 = vadd.f32 %v3062, %v2936
    %v3064 = vadd.f32 %v3063, %v2937
    %v3065 = vadd.f32 %v3064, %v2938
    %v3066 = vadd.f32 %v3065, %v2939
    %v3067 = vadd.f32 %v3066, %v2940
    %v3068 = vadd.f32 %v3067, %v2941
    %v3069 = vadd.f32 %v3068, %v2942
    %v3070 = vadd.f32 %v3069, %v2943
    %v3071 = vadd.f32 %v3070, %v2944
    %v3072 = vadd.f32 %v3071, %v2945
    %v3073 = vadd.f32 %v3072, %v2946
    %v3074 = vadd.f32 %v3073, %v2947
    %v3075 = vadd.f32 %v3074, %v2948
    %v3076 = vadd.f32 %v3075, %v2949
    %v3077 = vadd.f32 %v3076, %v2950
    %v3078 = vadd.f32 %v3077, %v2951
    %v3079 = vadd.f32 %v3078, %v2952
    %v3080 = vadd.f32 %v3079, %v2953
    %v3081 = vadd.f32 %v3080, %v2954
    %v3082 = vadd.f32 %v3081, %v2955
    %v3083 = vadd.f32 %v3082, %v2956
    %v3084 = vadd.f32 %v3083, %v2957
    %v3085 = vadd.f32 %v3084, %v2958
    %v3086 = vadd.f32 %v3085, %v2959
    %v3087 = vadd.f32 %v3086, %v2960
    %v3088 = vadd.f32 %v3087, %v2961
    %v3089 = vadd.f32 %v3088, %v2962
    %v3090 = vadd.f32 %v3089, %v2963
    %v3091 = vadd.f32 %v3090, %v2964
    %v3092 = vadd.f32 %v3091, %v2965
    %v3093 = vadd.f32 %v3092, %v2966
    %v3094 = vadd.f32 %v3093, %v2967
    %v3095 = vadd.f32 %v3094, %v2968
    %v3096 = vadd.f32 %v3095, %v2969
    %v3097 = vadd.f32 %v3096, %v2970
    %v3098 = vadd.f32 %v3097, %v2971
    %v3099 = vadd.f32 %v3098, %v2972
    %v3100 = vadd.f32 %v3099, %v2973
    %v3101 = vadd.f32 %v3100, %v2974
    %v3102 = vadd.f32 %v3101, %v2975
    %v3103 = vadd.f32 %v3102, %v2976
    %v3104 = vadd.f32 %v3103, %v2977
    %v3105 = vadd.f32 %v3104, %v2978
    %v3106 = vadd.f32 %v3105, %v2979
    %v3107 = vadd.f32 %v3106, %v2980
    %v3108 = vadd.f32 %v3107, %v2981
    %v3109 = vadd.f32 %v3108, %v2982
    %v3110 = vadd.f32 %v3109, %v2983
    %v3111 = vadd.f32 %v3110, %v2984
    %v3112 = vadd.f32 %v3111, %v2985
    %v3113 = vadd.f32 %v3112, %v2986
    %v3114 = vadd.f32 %v3113, %v2987
    %v3115 = vadd.f32 %v3114, %v2988
    %v3116 = vadd.f32 %v3115, %v2989
    %v3117 = vadd.f32 %v3116, %v2990
    %v3118 = vadd.f32 %v3117, %v2991
    %v3119 = vadd.f32 %v3118, %v2992
    %v3120 = vadd.f32 %v3119, %v2993
    %v3121 = vadd.f32 %v3120, %v2994
    %v3122 = vadd.f32 %v3121, %v2995
    %v3123 = vadd.f32 %v3122, %v2996
    %v3124 = vadd.f32 %v3123, %v2997
    %v3125 = vadd.f32 %v3124, %v2998
    %v3126 = vadd.f32 %v3125, %v2999
    %v3127 = vadd.f32 %v3126, %v3000
    %v3128 = vadd.f32 %v3127, %v3001
    %v3129 = vadd.f32 %v57, %v3128
    %3130 = vst [vmem:[#allocation7] sm:$0xff] %v3129
    // Predicated region
    $region22: #{tpu_custom_call.1} parent=1 // pred_check
      _
    $region23: #{tpu_custom_call.1} parent=1 // pred_check_branch
      %3132 = sbr.rel (0) target = $region25
    $region24: #{tpu_custom_call.1} parent=1 // pred_region
      %s3134 = ssub.s32 128, 128
      %3135 = vsyncadd [#allocation4], %s3134
      %s3137 = sshll.u32 [#allocation7], 4
      %s3138 = int_to_ptr.vmem [resolvable:$true] %s3137
      %3140 = dma.vmem_to_hbm [thread:$0]  %s3138, 128, %s2, [#allocation4]
    $region25: #{tpu_custom_call.1} parent=1 // pred_fallthru
      _
    // Predicated region
    $region26: #{tpu_custom_call.1} parent=1 // pred_check
      _
    $region27: #{tpu_custom_call.1} parent=1 // pred_check_branch
      %3142 = sbr.rel (0) target = $region29
    $region28: #{tpu_custom_call.1} parent=1 // pred_region
      %3143 = dma.done [#allocation4], 128
    $region29: #{tpu_custom_call.1} parent=1 // pred_fallthru
      _
    %3144 = vsyncpa [#allocation3], 1
    %3145 = vsyncpa [#allocation6], 1
    %3146 = vsyncpa [#allocation4], 1

</llo_original>
